<compile_context>
chip_gen: v7x
topology: tpu7x:2x2x1
jax: 0.10.0
libtpu: 0.0.40
codegen_flags: <defaults>
</compile_context>

<pallas_src>
import jax
import jax.numpy as jnp
from jax import lax
from jax.experimental import pallas as pl
from jax.experimental.pallas import tpu as pltpu


def _round_up(x, m):
    return ((x + m - 1) // m) * m


def _pad_gate_cols(w, H, Hp):
    """(..., 4H) -> (..., 4Hp): gate k placed at columns [k*Hp, k*Hp+H)."""
    parts = []
    for k in range(4):
        g = w[..., k * H:(k + 1) * H]
        pad = [(0, 0)] * (w.ndim - 1) + [(0, Hp - H)]
        parts.append(jnp.pad(g, pad))
    return jnp.concatenate(parts, axis=-1)


# ----------------------------------------------------------------------------
# Pallas kernel: fused bidirectional LSTM recurrence for one layer.
# grid = (2 directions [parallel], T_pad // Tc time chunks [arbitrary]).
# h/c live in f32 VMEM scratch across the (sequential) time-chunk axis.
# Per step it only computes h @ W_hh (bf16 MXU, f32 acc) + gate nonlinearities;
# the x @ W_ih + b term is streamed in as precomputed pre-gates.
# ----------------------------------------------------------------------------
def _make_bilstm_kernel(Tc, Hp, nT):
    def kernel(maxlen_ref, len_ref, pg_ref, whh_ref, o_ref, h_ref, c_ref):
        d = pl.program_id(0)       # 0 = forward, 1 = backward
        tc = pl.program_id(1)      # time-chunk index in processing order

        @pl.when(tc == 0)
        def _():
            h_ref[...] = jnp.zeros_like(h_ref)
            c_ref[...] = jnp.zeros_like(c_ref)

        # physical chunk touched this step (backward walks chunks in reverse)
        chunk = tc * (1 - d) + (nT - 1 - tc) * d
        base_t = chunk * Tc
        max_len = maxlen_ref[0]    # SMEM scalar: max valid length in batch

        @pl.when(base_t >= max_len)
        def _():
            # Whole chunk is past every sequence end: outputs are zero and the
            # recurrent state is untouched -> skip all compute.
            o_ref[...] = jnp.zeros_like(o_ref)

        @pl.when(base_t < max_len)
        def _():
            lens = len_ref[...]        # (Bp, 1) int32
            whh = whh_ref[...]         # (Hp, 4Hp) bf16

            def step(i, carry):
                # within-chunk index: forward 0..Tc-1, backward Tc-1..0
                j = i * (1 - d) + (Tc - 1 - i) * d
                t_global = base_t + j

                h = h_ref[...]
                c = c_ref[...]
                gates = pg_ref[j] + jnp.dot(
                    h.astype(jnp.bfloat16), whh,
                    preferred_element_type=jnp.float32)        # (Bp, 4Hp) f32

                # PyTorch LSTM gate order: i, f, g, o (128-lane aligned slices)
                i_g = jax.nn.sigmoid(gates[:, 0 * Hp:1 * Hp])
                f_g = jax.nn.sigmoid(gates[:, 1 * Hp:2 * Hp])
                g_g = jnp.tanh(gates[:, 2 * Hp:3 * Hp])
                o_g = jax.nn.sigmoid(gates[:, 3 * Hp:4 * Hp])

                c_new = f_g * c + i_g * g_g
                h_new = o_g * jnp.tanh(c_new)

                valid = t_global < lens                        # (Bp, 1) bool
                h_ref[...] = jnp.where(valid, h_new, h)
                c_ref[...] = jnp.where(valid, c_new, c)
                o_ref[j] = jnp.where(valid, h_new, 0.0)        # padded pos -> 0
                return carry

            lax.fori_loop(0, Tc, step, 0, unroll=True)

    return kernel


def bilstm_layer(max_len1, lengths2d, whh2, pg2, *, Tc):
    """Fused bidirectional LSTM recurrence for one layer.

    max_len1:  (1,) int32            (scalar-prefetched max sequence length)
    lengths2d: (Bp, 1) int32
    whh2:      (2, Hp, 4Hp) bfloat16 (per-direction recurrent weights)
    pg2:       (2, T_pad, Bp, 4Hp) f32 (precomputed x @ W_ih + b)
    returns    (T_pad, Bp, 2*Hp) f32 (fwd outputs in cols [:Hp], bwd in [Hp:])
    """
    _, T_pad, Bp, G = pg2.shape
    Hp = G // 4
    nT = T_pad // Tc
    kernel = _make_bilstm_kernel(Tc, Hp, nT)

    def chunk_idx(d, t):
        return t * (1 - d) + (nT - 1 - t) * d

    # VMEM residency estimate (double-buffered blocks + scratch).
    est = (2 * Hp * 4 * Hp * 2            # W_hh blocks (bf16)
           + 2 * Tc * Bp * 4 * Hp * 4     # pre-gate blocks (f32)
           + 2 * Tc * Bp * Hp * 4         # output blocks (f32)
           + 2 * Bp * Hp * 4              # h/c scratch
           + 2 * Bp * 4)                  # lengths
    vmem_limit = min(64 * 1024 * 1024, 2 * est + (4 << 20))

    return pl.pallas_call(
        kernel,
        out_shape=jax.ShapeDtypeStruct((T_pad, Bp, 2 * Hp), jnp.float32),
        grid_spec=pltpu.PrefetchScalarGridSpec(
            num_scalar_prefetch=1,
            grid=(2, nT),
            in_specs=[
                pl.BlockSpec((Bp, 1), lambda d, t, ml: (0, 0)),          # lens
                pl.BlockSpec((None, Tc, Bp, 4 * Hp),
                             lambda d, t, ml: (d, chunk_idx(d, t), 0, 0)),  # pg
                pl.BlockSpec((None, Hp, 4 * Hp),
                             lambda d, t, ml: (d, 0, 0)),                 # W_hh
            ],
            out_specs=pl.BlockSpec((Tc, Bp, Hp),
                                   lambda d, t, ml: (chunk_idx(d, t), 0, d)),
            scratch_shapes=[
                pltpu.VMEM((Bp, Hp), jnp.float32),  # h state
                pltpu.VMEM((Bp, Hp), jnp.float32),  # c state
            ],
        ),
        compiler_params=pltpu.CompilerParams(
            dimension_semantics=("parallel", "arbitrary"),  # dirs ||, time seq
            vmem_limit_bytes=vmem_limit),
    )(max_len1, lengths2d, pg2, whh2)


# ----------------------------------------------------------------------------
# RNNEncoder forward: glue (projection, padding, concat) in plain JAX,
# sequential recurrence in the Pallas kernel.
# ----------------------------------------------------------------------------
def rnn_encoder_forward(x, lengths, params, num_layers, *, time_chunk=8):
    """x: (B, T, input_size), lengths: (B,) -> (B, T, 2*hidden_size)."""
    B, T, _ = x.shape
    H = params[(0, 0)]["w_hh"].shape[0]
    Hp = _round_up(H, 128)      # lane-aligned hidden size
    Bp = _round_up(B, 8)        # sublane-aligned batch
    Tc = time_chunk
    T_pad = _round_up(T, Tc)

    # time-major + pad (padded rows/steps are masked out by lengths)
    h = jnp.transpose(x.astype(jnp.float32), (1, 0, 2))        # (T, B, D)
    h = jnp.pad(h, ((0, T_pad - T), (0, Bp - B), (0, 0)))
    lens = lengths.astype(jnp.int32)
    lens2d = jnp.pad(lens, (0, Bp - B)).reshape(Bp, 1)
    max_len1 = jnp.max(lens).reshape(1)                        # (1,) int32

    for l in range(num_layers):
        # kernel-friendly padded weights (gate blocks at k*Hp offsets)
        wih = jnp.stack([_pad_gate_cols(params[(l, d)]["w_ih"], H, Hp)
                         for d in range(2)]).astype(jnp.bfloat16)   # (2,D,4Hp)
        b = jnp.stack([_pad_gate_cols(params[(l, d)]["b"], H, Hp)[0]
                       for d in range(2)])                          # (2,4Hp)
        whh = jnp.stack([
            jnp.pad(_pad_gate_cols(params[(l, d)]["w_hh"], H, Hp),
                    ((0, Hp - H), (0, 0)))
            for d in range(2)]).astype(jnp.bfloat16)                # (2,Hp,4Hp)

        # hoisted input projection: one big bf16 MXU matmul over all T, both dirs
        pg = jnp.einsum("tbd,zdg->ztbg", h.astype(jnp.bfloat16), wih,
                        preferred_element_type=jnp.float32)
        pg = pg + b[:, None, None, :]                    # (2, T_pad, Bp, 4Hp)

        out = bilstm_layer(max_len1, lens2d, whh, pg, Tc=Tc)  # (T_pad,Bp,2Hp)

        # drop hidden-dim padding before feeding the next layer
        h = jnp.concatenate([out[..., :H], out[..., Hp:Hp + H]], axis=-1)

        # inter-layer dropout: identity (eval mode)

    # slice off time/batch padding, back to batch-first; final dropout = identity
    return jnp.transpose(h[:T, :B], (1, 0, 2))           # (B, T, 2H)


# ----------------------------------------------------------------------------
# Deterministic parameter init (same shapes as nn.LSTM, synthetic values)
# ----------------------------------------------------------------------------
def init_params(key, input_size, hidden_size, num_layers):
    params = {}
    k = 1.0 / (hidden_size ** 0.5)
    for l in range(num_layers):
        d_in = input_size if l == 0 else 2 * hidden_size
        for d in range(2):  # 0 = forward, 1 = backward
            key, k1, k2, k3, k4 = jax.random.split(key, 5)
            w_ih = jax.random.uniform(k1, (4 * hidden_size, d_in),
                                      minval=-k, maxval=k, dtype=jnp.float32)
            w_hh = jax.random.uniform(k2, (4 * hidden_size, hidden_size),
                                      minval=-k, maxval=k, dtype=jnp.float32)
            b_ih = jax.random.uniform(k3, (4 * hidden_size,),
                                      minval=-k, maxval=k, dtype=jnp.float32)
            b_hh = jax.random.uniform(k4, (4 * hidden_size,),
                                      minval=-k, maxval=k, dtype=jnp.float32)
            params[(l, d)] = {
                "w_ih": w_ih.T,                               # (D, 4H)
                "w_hh": w_hh.T,                               # (H, 4H)
                "b": (b_ih + b_hh).reshape(1, 4 * hidden_size),
            }
    return params


# ----------------------------------------------------------------------------
# Pure-JAX f32 reference (lax.scan) for correctness checking
# ----------------------------------------------------------------------------
def _ref_dir(x_tbd, lengths, w_ih, w_hh, b, reverse):
    T, B, _ = x_tbd.shape
    H = w_hh.shape[0]
    ts = jnp.arange(T)
    if reverse:
        ts = ts[::-1]

    def step(carry, t):
        h, c = carry
        gates = x_tbd[t] @ w_ih + h @ w_hh + b
        i = jax.nn.sigmoid(gates[:, :H])
        f = jax.nn.sigmoid(gates[:, H:2 * H])
        g = jnp.tanh(gates[:, 2 * H:3 * H])
        o = jax.nn.sigmoid(gates[:, 3 * H:4 * H])
        c_new = f * c + i * g
        h_new = o * jnp.tanh(c_new)
        mask = (t < lengths).astype(jnp.float32)[:, None]
        h = mask * h_new + (1 - mask) * h
        c = mask * c_new + (1 - mask) * c
        return (h, c), (t, mask * h_new)

    init = (jnp.zeros((B, H), jnp.float32), jnp.zeros((B, H), jnp.float32))
    _, (t_idx, outs) = lax.scan(step, init, ts)
    return jnp.zeros((T, B, H), jnp.float32).at[t_idx].set(outs)


def rnn_encoder_ref(x, lengths, params, num_layers):
    B, T, _ = x.shape
    h = jnp.transpose(x.astype(jnp.float32), (1, 0, 2))
    for l in range(num_layers):
        outs = [
            _ref_dir(h, lengths, params[(l, d)]["w_ih"], params[(l, d)]["w_hh"],
                     params[(l, d)]["b"], rev)
            for d, rev in enumerate((False, True))
        ]
        h = jnp.concatenate(outs, axis=-1)
    return jnp.transpose(h, (1, 0, 2))


if __name__ == "__main__":
    BATCH, SEQ, INPUT_SIZE, HIDDEN, NUM_LAYERS = 4, 8, 16, 32, 2

    key = jax.random.PRNGKey(0)
    key, kx = jax.random.split(key)
    x = jax.random.normal(kx, (BATCH, SEQ, INPUT_SIZE), dtype=jnp.float32)
    lengths = jnp.array([8, 5, 3, 6], dtype=jnp.int32)

    params = init_params(key, INPUT_SIZE, HIDDEN, NUM_LAYERS)

    out = rnn_encoder_forward(x, lengths, params, NUM_LAYERS)
    out = jax.block_until_ready(out)
    assert out.shape == (BATCH, SEQ, 2 * HIDDEN), out.shape

    ref = jax.block_until_ready(rnn_encoder_ref(x, lengths, params, NUM_LAYERS))
    # bf16 MXU inputs (f32 accumulation / f32 state) -> looser tolerance than
    # the pure-f32 reference would need.
    err = float(jnp.max(jnp.abs(out - ref)))
    assert err < 3e-2, err

    print("KERNEL_OK")
</pallas_src>

<mosaic_0001>
module attributes {stable_mosaic.version = 11 : i64} {
  func.func @kernel(%arg0: i32, %arg1: i32, %arg2: memref<1xi32, #tpu.memory_space<smem>>, %arg3: memref<8x1xi32, #tpu.memory_space<vmem>>, %arg4: memref<1x8x8x512xf32, #tpu.memory_space<vmem>>, %arg5: memref<1x128x512xbf16, #tpu.memory_space<vmem>>, %arg6: memref<8x8x128xf32, #tpu.memory_space<vmem>>, %arg7: memref<8x128xf32, #tpu.memory_space<vmem>>, %arg8: memref<8x128xf32, #tpu.memory_space<vmem>>) attributes {dimension_semantics = [#tpu.dimension_semantics<parallel>, #tpu.dimension_semantics<arbitrary>], iteration_bounds = array<i64: 2, 1>, scalar_prefetch = 1 : i64, scratch_operands = 2 : i64, tpu.core_type = #tpu.core_type<tc>, window_params = [{pipeline_mode = #tpu.pipeline_mode<synchronous>, transform_indices = @transform_0, window_bounds = array<i64: 8, 1>}, {transform_indices = @transform_1, window_bounds = array<i64: 1, 8, 8, 512>}, {transform_indices = @transform_2, window_bounds = array<i64: 1, 128, 512>}, {transform_indices = @transform_3, window_bounds = array<i64: 8, 8, 128>}]} {
    %c0_i32 = arith.constant 0 : i32
    %0 = arith.cmpi eq, %arg1, %c0_i32 : i32
    %1 = arith.extui %0 : i1 to i32
    %c0_i32_0 = arith.constant 0 : i32
    %2 = arith.cmpi ne, %1, %c0_i32_0 : i32
    scf.if %2 {
      %cst = arith.constant 0.000000e+00 : f32
      %16 = vector.broadcast %cst : f32 to vector<8x128xf32>
      %c0_4 = arith.constant 0 : index
      %c0_5 = arith.constant 0 : index
      %17 = vector.load %arg7[%c0_4, %c0_5] : memref<8x128xf32, #tpu.memory_space<vmem>>, vector<8x128xf32>
      tpu.vector_store %arg7[%c0_4, %c0_5], %16 {strides = array<i32>} : memref<8x128xf32, #tpu.memory_space<vmem>>, vector<8x128xf32>,
      %cst_6 = arith.constant 0.000000e+00 : f32
      %18 = vector.broadcast %cst_6 : f32 to vector<8x128xf32>
      %c0_7 = arith.constant 0 : index
      %c0_8 = arith.constant 0 : index
      %19 = vector.load %arg8[%c0_7, %c0_8] : memref<8x128xf32, #tpu.memory_space<vmem>>, vector<8x128xf32>
      tpu.vector_store %arg8[%c0_7, %c0_8], %18 {strides = array<i32>} : memref<8x128xf32, #tpu.memory_space<vmem>>, vector<8x128xf32>,
    } else {
    }
    %c1_i32 = arith.constant 1 : i32
    %3 = arith.subi %c1_i32, %arg0 : i32
    %4 = arith.muli %arg1, %3 : i32
    %c0_i32_1 = arith.constant 0 : i32
    %5 = arith.subi %c0_i32_1, %arg1 : i32
    %6 = arith.muli %5, %arg0 : i32
    %7 = arith.addi %4, %6 : i32
    %c8_i32 = arith.constant 8 : i32
    %8 = arith.muli %7, %c8_i32 : i32
    %c0 = arith.constant 0 : index
    %9 = memref.load %arg2[%c0] : memref<1xi32, #tpu.memory_space<smem>>
    %10 = arith.cmpi sge, %8, %9 : i32
    %11 = arith.extui %10 : i1 to i32
    %c0_i32_2 = arith.constant 0 : i32
    %12 = arith.cmpi ne, %11, %c0_i32_2 : i32
    scf.if %12 {
      %cst = arith.constant 0.000000e+00 : f32
      %16 = vector.broadcast %cst : f32 to vector<8x8x128xf32>
      %c0_4 = arith.constant 0 : index
      %c0_5 = arith.constant 0 : index
      %c0_6 = arith.constant 0 : index
      %17 = vector.load %arg6[%c0_4, %c0_5, %c0_6] : memref<8x8x128xf32, #tpu.memory_space<vmem>>, vector<8x8x128xf32>
      tpu.vector_store %arg6[%c0_4, %c0_5, %c0_6], %16 {strides = array<i32>} : memref<8x8x128xf32, #tpu.memory_space<vmem>>, vector<8x8x128xf32>,
    } else {
    }
    %13 = arith.cmpi slt, %8, %9 : i32
    %14 = arith.extui %13 : i1 to i32
    %c0_i32_3 = arith.constant 0 : i32
    %15 = arith.cmpi ne, %14, %c0_i32_3 : i32
    scf.if %15 {
      %c0_4 = arith.constant 0 : index
      %c0_5 = arith.constant 0 : index
      %16 = vector.load %arg3[%c0_4, %c0_5] : memref<8x1xi32, #tpu.memory_space<vmem>>, vector<8x1xi32>
      %c0_6 = arith.constant 0 : index
      %c0_7 = arith.constant 0 : index
      %c0_8 = arith.constant 0 : index
      %17 = vector.load %arg5[%c0_6, %c0_7, %c0_8] : memref<1x128x512xbf16, #tpu.memory_space<vmem>>, vector<1x128x512xbf16>
      %18 = vector.shape_cast %17 : vector<1x128x512xbf16> to vector<128x512xbf16>
      %c0_i32_9 = arith.constant 0 : i32
      %c1_i32_10 = arith.constant 1 : i32
      %19 = arith.subi %c1_i32_10, %arg0 : i32
      %20 = arith.muli %c0_i32_9, %19 : i32
      %c7_i32 = arith.constant 7 : i32
      %21 = arith.subi %c7_i32, %c0_i32_9 : i32
      %22 = arith.muli %21, %arg0 : i32
      %23 = arith.addi %20, %22 : i32
      %24 = arith.addi %8, %23 : i32
      %c0_11 = arith.constant 0 : index
      %c0_12 = arith.constant 0 : index
      %25 = vector.load %arg7[%c0_11, %c0_12] : memref<8x128xf32, #tpu.memory_space<vmem>>, vector<8x128xf32>
      %c0_13 = arith.constant 0 : index
      %c0_14 = arith.constant 0 : index
      %26 = vector.load %arg8[%c0_13, %c0_14] : memref<8x128xf32, #tpu.memory_space<vmem>>, vector<8x128xf32>
      %c0_15 = arith.constant 0 : index
      %27 = arith.index_cast %23 : i32 to index
      %c0_16 = arith.constant 0 : index
      %c0_17 = arith.constant 0 : index
      %28 = vector.load %arg4[%c0_15, %27, %c0_16, %c0_17] : memref<1x8x8x512xf32, #tpu.memory_space<vmem>>, vector<1x1x8x512xf32>
      %29 = vector.shape_cast %28 : vector<1x1x8x512xf32> to vector<8x512xf32>
      %30 = arith.truncf %25 : vector<8x128xf32> to vector<8x128xbf16>
      %cst = arith.constant dense<0.000000e+00> : vector<8x512xf32>
      %31 = tpu.matmul %30, %18, %cst {dimension_numbers = #tpu.dot_dimension_numbers<[1], [0], [0], [1], [0, 0, 1, 1], [], []>} : vector<8x128xbf16>, vector<128x512xbf16>, vector<8x512xf32> -> vector<8x512xf32>
      %32 = arith.addf %29, %31 : vector<8x512xf32>
      %33 = vector.extract_strided_slice %32 {offsets = [0, 0], sizes = [8, 128], strides = [1, 1]} : vector<8x512xf32> to vector<8x128xf32>
      %34 = arith.negf %33 : vector<8x128xf32>
      %35 = math.exp %34 : vector<8x128xf32>
      %cst_18 = arith.constant 1.000000e+00 : f32
      %36 = vector.broadcast %cst_18 : f32 to vector<8x128xf32>
      %37 = arith.addf %36, %35 : vector<8x128xf32>
      %38 = arith.divf %36, %37 : vector<8x128xf32>
      %39 = vector.extract_strided_slice %32 {offsets = [0, 128], sizes = [8, 128], strides = [1, 1]} : vector<8x512xf32> to vector<8x128xf32>
      %40 = arith.negf %39 : vector<8x128xf32>
      %41 = math.exp %40 : vector<8x128xf32>
      %cst_19 = arith.constant 1.000000e+00 : f32
      %42 = vector.broadcast %cst_19 : f32 to vector<8x128xf32>
      %43 = arith.addf %42, %41 : vector<8x128xf32>
      %44 = arith.divf %42, %43 : vector<8x128xf32>
      %45 = vector.extract_strided_slice %32 {offsets = [0, 256], sizes = [8, 128], strides = [1, 1]} : vector<8x512xf32> to vector<8x128xf32>
      %46 = math.tanh %45 : vector<8x128xf32>
      %47 = vector.extract_strided_slice %32 {offsets = [0, 384], sizes = [8, 128], strides = [1, 1]} : vector<8x512xf32> to vector<8x128xf32>
      %48 = arith.negf %47 : vector<8x128xf32>
      %49 = math.exp %48 : vector<8x128xf32>
      %cst_20 = arith.constant 1.000000e+00 : f32
      %50 = vector.broadcast %cst_20 : f32 to vector<8x128xf32>
      %51 = arith.addf %50, %49 : vector<8x128xf32>
      %52 = arith.divf %50, %51 : vector<8x128xf32>
      %53 = arith.mulf %44, %26 : vector<8x128xf32>
      %54 = arith.mulf %38, %46 : vector<8x128xf32>
      %55 = arith.addf %53, %54 : vector<8x128xf32>
      %56 = math.tanh %55 : vector<8x128xf32>
      %57 = arith.mulf %52, %56 : vector<8x128xf32>
      %58 = vector.broadcast %24 : i32 to vector<8x1xi32>
      %59 = arith.cmpi slt, %58, %16 : vector<8x1xi32>
      %60 = vector.shape_cast %59 : vector<8x1xi1> to vector<8x1xi1>
      %61 = vector.broadcast %60 : vector<8x1xi1> to vector<8x128xi1>
      %62 = arith.select %61, %57, %25 : vector<8x128xi1>, vector<8x128xf32>
      %c0_21 = arith.constant 0 : index
      %c0_22 = arith.constant 0 : index
      %63 = vector.load %arg7[%c0_21, %c0_22] : memref<8x128xf32, #tpu.memory_space<vmem>>, vector<8x128xf32>
      tpu.vector_store %arg7[%c0_21, %c0_22], %62 {strides = array<i32>} : memref<8x128xf32, #tpu.memory_space<vmem>>, vector<8x128xf32>,
      %64 = vector.shape_cast %59 : vector<8x1xi1> to vector<8x1xi1>
      %65 = vector.broadcast %64 : vector<8x1xi1> to vector<8x128xi1>
      %66 = arith.select %65, %55, %26 : vector<8x128xi1>, vector<8x128xf32>
      %c0_23 = arith.constant 0 : index
      %c0_24 = arith.constant 0 : index
      %67 = vector.load %arg8[%c0_23, %c0_24] : memref<8x128xf32, #tpu.memory_space<vmem>>, vector<8x128xf32>
      tpu.vector_store %arg8[%c0_23, %c0_24], %66 {strides = array<i32>} : memref<8x128xf32, #tpu.memory_space<vmem>>, vector<8x128xf32>,
      %cst_25 = arith.constant 0.000000e+00 : f32
      %68 = vector.shape_cast %59 : vector<8x1xi1> to vector<8x1xi1>
      %69 = vector.broadcast %68 : vector<8x1xi1> to vector<8x128xi1>
      %70 = vector.broadcast %cst_25 : f32 to vector<8x128xf32>
      %71 = arith.select %69, %57, %70 : vector<8x128xi1>, vector<8x128xf32>
      %72 = arith.index_cast %23 : i32 to index
      %c0_26 = arith.constant 0 : index
      %c0_27 = arith.constant 0 : index
      %73 = vector.load %arg6[%72, %c0_26, %c0_27] : memref<8x8x128xf32, #tpu.memory_space<vmem>>, vector<1x8x128xf32>
      %74 = vector.shape_cast %73 : vector<1x8x128xf32> to vector<8x128xf32>
      %75 = vector.shape_cast %71 : vector<8x128xf32> to vector<1x8x128xf32>
      tpu.vector_store %arg6[%72, %c0_26, %c0_27], %75 {strides = array<i32>} : memref<8x8x128xf32, #tpu.memory_space<vmem>>, vector<1x8x128xf32>,
      %c1_i32_28 = arith.constant 1 : i32
      %c1_i32_29 = arith.constant 1 : i32
      %76 = arith.subi %c1_i32_29, %arg0 : i32
      %77 = arith.muli %c1_i32_28, %76 : i32
      %c7_i32_30 = arith.constant 7 : i32
      %78 = arith.subi %c7_i32_30, %c1_i32_28 : i32
      %79 = arith.muli %78, %arg0 : i32
      %80 = arith.addi %77, %79 : i32
      %81 = arith.addi %8, %80 : i32
      %c0_31 = arith.constant 0 : index
      %c0_32 = arith.constant 0 : index
      %82 = vector.load %arg7[%c0_31, %c0_32] : memref<8x128xf32, #tpu.memory_space<vmem>>, vector<8x128xf32>
      %c0_33 = arith.constant 0 : index
      %c0_34 = arith.constant 0 : index
      %83 = vector.load %arg8[%c0_33, %c0_34] : memref<8x128xf32, #tpu.memory_space<vmem>>, vector<8x128xf32>
      %c0_35 = arith.constant 0 : index
      %84 = arith.index_cast %80 : i32 to index
      %c0_36 = arith.constant 0 : index
      %c0_37 = arith.constant 0 : index
      %85 = vector.load %arg4[%c0_35, %84, %c0_36, %c0_37] : memref<1x8x8x512xf32, #tpu.memory_space<vmem>>, vector<1x1x8x512xf32>
      %86 = vector.shape_cast %85 : vector<1x1x8x512xf32> to vector<8x512xf32>
      %87 = arith.truncf %82 : vector<8x128xf32> to vector<8x128xbf16>
      %cst_38 = arith.constant dense<0.000000e+00> : vector<8x512xf32>
      %88 = tpu.matmul %87, %18, %cst_38 {dimension_numbers = #tpu.dot_dimension_numbers<[1], [0], [0], [1], [0, 0, 1, 1], [], []>} : vector<8x128xbf16>, vector<128x512xbf16>, vector<8x512xf32> -> vector<8x512xf32>
      %89 = arith.addf %86, %88 : vector<8x512xf32>
      %90 = vector.extract_strided_slice %89 {offsets = [0, 0], sizes = [8, 128], strides = [1, 1]} : vector<8x512xf32> to vector<8x128xf32>
      %91 = arith.negf %90 : vector<8x128xf32>
      %92 = math.exp %91 : vector<8x128xf32>
      %cst_39 = arith.constant 1.000000e+00 : f32
      %93 = vector.broadcast %cst_39 : f32 to vector<8x128xf32>
      %94 = arith.addf %93, %92 : vector<8x128xf32>
      %95 = arith.divf %93, %94 : vector<8x128xf32>
      %96 = vector.extract_strided_slice %89 {offsets = [0, 128], sizes = [8, 128], strides = [1, 1]} : vector<8x512xf32> to vector<8x128xf32>
      %97 = arith.negf %96 : vector<8x128xf32>
      %98 = math.exp %97 : vector<8x128xf32>
      %cst_40 = arith.constant 1.000000e+00 : f32
      %99 = vector.broadcast %cst_40 : f32 to vector<8x128xf32>
      %100 = arith.addf %99, %98 : vector<8x128xf32>
      %101 = arith.divf %99, %100 : vector<8x128xf32>
      %102 = vector.extract_strided_slice %89 {offsets = [0, 256], sizes = [8, 128], strides = [1, 1]} : vector<8x512xf32> to vector<8x128xf32>
      %103 = math.tanh %102 : vector<8x128xf32>
      %104 = vector.extract_strided_slice %89 {offsets = [0, 384], sizes = [8, 128], strides = [1, 1]} : vector<8x512xf32> to vector<8x128xf32>
      %105 = arith.negf %104 : vector<8x128xf32>
      %106 = math.exp %105 : vector<8x128xf32>
      %cst_41 = arith.constant 1.000000e+00 : f32
      %107 = vector.broadcast %cst_41 : f32 to vector<8x128xf32>
      %108 = arith.addf %107, %106 : vector<8x128xf32>
      %109 = arith.divf %107, %108 : vector<8x128xf32>
      %110 = arith.mulf %101, %83 : vector<8x128xf32>
      %111 = arith.mulf %95, %103 : vector<8x128xf32>
      %112 = arith.addf %110, %111 : vector<8x128xf32>
      %113 = math.tanh %112 : vector<8x128xf32>
      %114 = arith.mulf %109, %113 : vector<8x128xf32>
      %115 = vector.broadcast %81 : i32 to vector<8x1xi32>
      %116 = arith.cmpi slt, %115, %16 : vector<8x1xi32>
      %117 = vector.shape_cast %116 : vector<8x1xi1> to vector<8x1xi1>
      %118 = vector.broadcast %117 : vector<8x1xi1> to vector<8x128xi1>
      %119 = arith.select %118, %114, %82 : vector<8x128xi1>, vector<8x128xf32>
      %c0_42 = arith.constant 0 : index
      %c0_43 = arith.constant 0 : index
      %120 = vector.load %arg7[%c0_42, %c0_43] : memref<8x128xf32, #tpu.memory_space<vmem>>, vector<8x128xf32>
      tpu.vector_store %arg7[%c0_42, %c0_43], %119 {strides = array<i32>} : memref<8x128xf32, #tpu.memory_space<vmem>>, vector<8x128xf32>,
      %121 = vector.shape_cast %116 : vector<8x1xi1> to vector<8x1xi1>
      %122 = vector.broadcast %121 : vector<8x1xi1> to vector<8x128xi1>
      %123 = arith.select %122, %112, %83 : vector<8x128xi1>, vector<8x128xf32>
      %c0_44 = arith.constant 0 : index
      %c0_45 = arith.constant 0 : index
      %124 = vector.load %arg8[%c0_44, %c0_45] : memref<8x128xf32, #tpu.memory_space<vmem>>, vector<8x128xf32>
      tpu.vector_store %arg8[%c0_44, %c0_45], %123 {strides = array<i32>} : memref<8x128xf32, #tpu.memory_space<vmem>>, vector<8x128xf32>,
      %cst_46 = arith.constant 0.000000e+00 : f32
      %125 = vector.shape_cast %116 : vector<8x1xi1> to vector<8x1xi1>
      %126 = vector.broadcast %125 : vector<8x1xi1> to vector<8x128xi1>
      %127 = vector.broadcast %cst_46 : f32 to vector<8x128xf32>
      %128 = arith.select %126, %114, %127 : vector<8x128xi1>, vector<8x128xf32>
      %129 = arith.index_cast %80 : i32 to index
      %c0_47 = arith.constant 0 : index
      %c0_48 = arith.constant 0 : index
      %130 = vector.load %arg6[%129, %c0_47, %c0_48] : memref<8x8x128xf32, #tpu.memory_space<vmem>>, vector<1x8x128xf32>
      %131 = vector.shape_cast %130 : vector<1x8x128xf32> to vector<8x128xf32>
      %132 = vector.shape_cast %128 : vector<8x128xf32> to vector<1x8x128xf32>
      tpu.vector_store %arg6[%129, %c0_47, %c0_48], %132 {strides = array<i32>} : memref<8x8x128xf32, #tpu.memory_space<vmem>>, vector<1x8x128xf32>,
      %c2_i32 = arith.constant 2 : i32
      %c1_i32_49 = arith.constant 1 : i32
      %133 = arith.subi %c1_i32_49, %arg0 : i32
      %134 = arith.muli %c2_i32, %133 : i32
      %c7_i32_50 = arith.constant 7 : i32
      %135 = arith.subi %c7_i32_50, %c2_i32 : i32
      %136 = arith.muli %135, %arg0 : i32
      %137 = arith.addi %134, %136 : i32
      %138 = arith.addi %8, %137 : i32
      %c0_51 = arith.constant 0 : index
      %c0_52 = arith.constant 0 : index
      %139 = vector.load %arg7[%c0_51, %c0_52] : memref<8x128xf32, #tpu.memory_space<vmem>>, vector<8x128xf32>
      %c0_53 = arith.constant 0 : index
      %c0_54 = arith.constant 0 : index
      %140 = vector.load %arg8[%c0_53, %c0_54] : memref<8x128xf32, #tpu.memory_space<vmem>>, vector<8x128xf32>
      %c0_55 = arith.constant 0 : index
      %141 = arith.index_cast %137 : i32 to index
      %c0_56 = arith.constant 0 : index
      %c0_57 = arith.constant 0 : index
      %142 = vector.load %arg4[%c0_55, %141, %c0_56, %c0_57] : memref<1x8x8x512xf32, #tpu.memory_space<vmem>>, vector<1x1x8x512xf32>
      %143 = vector.shape_cast %142 : vector<1x1x8x512xf32> to vector<8x512xf32>
      %144 = arith.truncf %139 : vector<8x128xf32> to vector<8x128xbf16>
      %cst_58 = arith.constant dense<0.000000e+00> : vector<8x512xf32>
      %145 = tpu.matmul %144, %18, %cst_58 {dimension_numbers = #tpu.dot_dimension_numbers<[1], [0], [0], [1], [0, 0, 1, 1], [], []>} : vector<8x128xbf16>, vector<128x512xbf16>, vector<8x512xf32> -> vector<8x512xf32>
      %146 = arith.addf %143, %145 : vector<8x512xf32>
      %147 = vector.extract_strided_slice %146 {offsets = [0, 0], sizes = [8, 128], strides = [1, 1]} : vector<8x512xf32> to vector<8x128xf32>
      %148 = arith.negf %147 : vector<8x128xf32>
      %149 = math.exp %148 : vector<8x128xf32>
      %cst_59 = arith.constant 1.000000e+00 : f32
      %150 = vector.broadcast %cst_59 : f32 to vector<8x128xf32>
      %151 = arith.addf %150, %149 : vector<8x128xf32>
      %152 = arith.divf %150, %151 : vector<8x128xf32>
      %153 = vector.extract_strided_slice %146 {offsets = [0, 128], sizes = [8, 128], strides = [1, 1]} : vector<8x512xf32> to vector<8x128xf32>
      %154 = arith.negf %153 : vector<8x128xf32>
      %155 = math.exp %154 : vector<8x128xf32>
      %cst_60 = arith.constant 1.000000e+00 : f32
      %156 = vector.broadcast %cst_60 : f32 to vector<8x128xf32>
      %157 = arith.addf %156, %155 : vector<8x128xf32>
      %158 = arith.divf %156, %157 : vector<8x128xf32>
      %159 = vector.extract_strided_slice %146 {offsets = [0, 256], sizes = [8, 128], strides = [1, 1]} : vector<8x512xf32> to vector<8x128xf32>
      %160 = math.tanh %159 : vector<8x128xf32>
      %161 = vector.extract_strided_slice %146 {offsets = [0, 384], sizes = [8, 128], strides = [1, 1]} : vector<8x512xf32> to vector<8x128xf32>
      %162 = arith.negf %161 : vector<8x128xf32>
      %163 = math.exp %162 : vector<8x128xf32>
      %cst_61 = arith.constant 1.000000e+00 : f32
      %164 = vector.broadcast %cst_61 : f32 to vector<8x128xf32>
      %165 = arith.addf %164, %163 : vector<8x128xf32>
      %166 = arith.divf %164, %165 : vector<8x128xf32>
      %167 = arith.mulf %158, %140 : vector<8x128xf32>
      %168 = arith.mulf %152, %160 : vector<8x128xf32>
      %169 = arith.addf %167, %168 : vector<8x128xf32>
      %170 = math.tanh %169 : vector<8x128xf32>
      %171 = arith.mulf %166, %170 : vector<8x128xf32>
      %172 = vector.broadcast %138 : i32 to vector<8x1xi32>
      %173 = arith.cmpi slt, %172, %16 : vector<8x1xi32>
      %174 = vector.shape_cast %173 : vector<8x1xi1> to vector<8x1xi1>
      %175 = vector.broadcast %174 : vector<8x1xi1> to vector<8x128xi1>
      %176 = arith.select %175, %171, %139 : vector<8x128xi1>, vector<8x128xf32>
      %c0_62 = arith.constant 0 : index
      %c0_63 = arith.constant 0 : index
      %177 = vector.load %arg7[%c0_62, %c0_63] : memref<8x128xf32, #tpu.memory_space<vmem>>, vector<8x128xf32>
      tpu.vector_store %arg7[%c0_62, %c0_63], %176 {strides = array<i32>} : memref<8x128xf32, #tpu.memory_space<vmem>>, vector<8x128xf32>,
      %178 = vector.shape_cast %173 : vector<8x1xi1> to vector<8x1xi1>
      %179 = vector.broadcast %178 : vector<8x1xi1> to vector<8x128xi1>
      %180 = arith.select %179, %169, %140 : vector<8x128xi1>, vector<8x128xf32>
      %c0_64 = arith.constant 0 : index
      %c0_65 = arith.constant 0 : index
      %181 = vector.load %arg8[%c0_64, %c0_65] : memref<8x128xf32, #tpu.memory_space<vmem>>, vector<8x128xf32>
      tpu.vector_store %arg8[%c0_64, %c0_65], %180 {strides = array<i32>} : memref<8x128xf32, #tpu.memory_space<vmem>>, vector<8x128xf32>,
      %cst_66 = arith.constant 0.000000e+00 : f32
      %182 = vector.shape_cast %173 : vector<8x1xi1> to vector<8x1xi1>
      %183 = vector.broadcast %182 : vector<8x1xi1> to vector<8x128xi1>
      %184 = vector.broadcast %cst_66 : f32 to vector<8x128xf32>
      %185 = arith.select %183, %171, %184 : vector<8x128xi1>, vector<8x128xf32>
      %186 = arith.index_cast %137 : i32 to index
      %c0_67 = arith.constant 0 : index
      %c0_68 = arith.constant 0 : index
      %187 = vector.load %arg6[%186, %c0_67, %c0_68] : memref<8x8x128xf32, #tpu.memory_space<vmem>>, vector<1x8x128xf32>
      %188 = vector.shape_cast %187 : vector<1x8x128xf32> to vector<8x128xf32>
      %189 = vector.shape_cast %185 : vector<8x128xf32> to vector<1x8x128xf32>
      tpu.vector_store %arg6[%186, %c0_67, %c0_68], %189 {strides = array<i32>} : memref<8x8x128xf32, #tpu.memory_space<vmem>>, vector<1x8x128xf32>,
      %c3_i32 = arith.constant 3 : i32
      %c1_i32_69 = arith.constant 1 : i32
      %190 = arith.subi %c1_i32_69, %arg0 : i32
      %191 = arith.muli %c3_i32, %190 : i32
      %c7_i32_70 = arith.constant 7 : i32
      %192 = arith.subi %c7_i32_70, %c3_i32 : i32
      %193 = arith.muli %192, %arg0 : i32
      %194 = arith.addi %191, %193 : i32
      %195 = arith.addi %8, %194 : i32
      %c0_71 = arith.constant 0 : index
      %c0_72 = arith.constant 0 : index
      %196 = vector.load %arg7[%c0_71, %c0_72] : memref<8x128xf32, #tpu.memory_space<vmem>>, vector<8x128xf32>
      %c0_73 = arith.constant 0 : index
      %c0_74 = arith.constant 0 : index
      %197 = vector.load %arg8[%c0_73, %c0_74] : memref<8x128xf32, #tpu.memory_space<vmem>>, vector<8x128xf32>
      %c0_75 = arith.constant 0 : index
      %198 = arith.index_cast %194 : i32 to index
      %c0_76 = arith.constant 0 : index
      %c0_77 = arith.constant 0 : index
      %199 = vector.load %arg4[%c0_75, %198, %c0_76, %c0_77] : memref<1x8x8x512xf32, #tpu.memory_space<vmem>>, vector<1x1x8x512xf32>
      %200 = vector.shape_cast %199 : vector<1x1x8x512xf32> to vector<8x512xf32>
      %201 = arith.truncf %196 : vector<8x128xf32> to vector<8x128xbf16>
      %cst_78 = arith.constant dense<0.000000e+00> : vector<8x512xf32>
      %202 = tpu.matmul %201, %18, %cst_78 {dimension_numbers = #tpu.dot_dimension_numbers<[1], [0], [0], [1], [0, 0, 1, 1], [], []>} : vector<8x128xbf16>, vector<128x512xbf16>, vector<8x512xf32> -> vector<8x512xf32>
      %203 = arith.addf %200, %202 : vector<8x512xf32>
      %204 = vector.extract_strided_slice %203 {offsets = [0, 0], sizes = [8, 128], strides = [1, 1]} : vector<8x512xf32> to vector<8x128xf32>
      %205 = arith.negf %204 : vector<8x128xf32>
      %206 = math.exp %205 : vector<8x128xf32>
      %cst_79 = arith.constant 1.000000e+00 : f32
      %207 = vector.broadcast %cst_79 : f32 to vector<8x128xf32>
      %208 = arith.addf %207, %206 : vector<8x128xf32>
      %209 = arith.divf %207, %208 : vector<8x128xf32>
      %210 = vector.extract_strided_slice %203 {offsets = [0, 128], sizes = [8, 128], strides = [1, 1]} : vector<8x512xf32> to vector<8x128xf32>
      %211 = arith.negf %210 : vector<8x128xf32>
      %212 = math.exp %211 : vector<8x128xf32>
      %cst_80 = arith.constant 1.000000e+00 : f32
      %213 = vector.broadcast %cst_80 : f32 to vector<8x128xf32>
      %214 = arith.addf %213, %212 : vector<8x128xf32>
      %215 = arith.divf %213, %214 : vector<8x128xf32>
      %216 = vector.extract_strided_slice %203 {offsets = [0, 256], sizes = [8, 128], strides = [1, 1]} : vector<8x512xf32> to vector<8x128xf32>
      %217 = math.tanh %216 : vector<8x128xf32>
      %218 = vector.extract_strided_slice %203 {offsets = [0, 384], sizes = [8, 128], strides = [1, 1]} : vector<8x512xf32> to vector<8x128xf32>
      %219 = arith.negf %218 : vector<8x128xf32>
      %220 = math.exp %219 : vector<8x128xf32>
      %cst_81 = arith.constant 1.000000e+00 : f32
      %221 = vector.broadcast %cst_81 : f32 to vector<8x128xf32>
      %222 = arith.addf %221, %220 : vector<8x128xf32>
      %223 = arith.divf %221, %222 : vector<8x128xf32>
      %224 = arith.mulf %215, %197 : vector<8x128xf32>
      %225 = arith.mulf %209, %217 : vector<8x128xf32>
      %226 = arith.addf %224, %225 : vector<8x128xf32>
      %227 = math.tanh %226 : vector<8x128xf32>
      %228 = arith.mulf %223, %227 : vector<8x128xf32>
      %229 = vector.broadcast %195 : i32 to vector<8x1xi32>
      %230 = arith.cmpi slt, %229, %16 : vector<8x1xi32>
      %231 = vector.shape_cast %230 : vector<8x1xi1> to vector<8x1xi1>
      %232 = vector.broadcast %231 : vector<8x1xi1> to vector<8x128xi1>
      %233 = arith.select %232, %228, %196 : vector<8x128xi1>, vector<8x128xf32>
      %c0_82 = arith.constant 0 : index
      %c0_83 = arith.constant 0 : index
      %234 = vector.load %arg7[%c0_82, %c0_83] : memref<8x128xf32, #tpu.memory_space<vmem>>, vector<8x128xf32>
      tpu.vector_store %arg7[%c0_82, %c0_83], %233 {strides = array<i32>} : memref<8x128xf32, #tpu.memory_space<vmem>>, vector<8x128xf32>,
      %235 = vector.shape_cast %230 : vector<8x1xi1> to vector<8x1xi1>
      %236 = vector.broadcast %235 : vector<8x1xi1> to vector<8x128xi1>
      %237 = arith.select %236, %226, %197 : vector<8x128xi1>, vector<8x128xf32>
      %c0_84 = arith.constant 0 : index
      %c0_85 = arith.constant 0 : index
      %238 = vector.load %arg8[%c0_84, %c0_85] : memref<8x128xf32, #tpu.memory_space<vmem>>, vector<8x128xf32>
      tpu.vector_store %arg8[%c0_84, %c0_85], %237 {strides = array<i32>} : memref<8x128xf32, #tpu.memory_space<vmem>>, vector<8x128xf32>,
      %cst_86 = arith.constant 0.000000e+00 : f32
      %239 = vector.shape_cast %230 : vector<8x1xi1> to vector<8x1xi1>
      %240 = vector.broadcast %239 : vector<8x1xi1> to vector<8x128xi1>
      %241 = vector.broadcast %cst_86 : f32 to vector<8x128xf32>
      %242 = arith.select %240, %228, %241 : vector<8x128xi1>, vector<8x128xf32>
      %243 = arith.index_cast %194 : i32 to index
      %c0_87 = arith.constant 0 : index
      %c0_88 = arith.constant 0 : index
      %244 = vector.load %arg6[%243, %c0_87, %c0_88] : memref<8x8x128xf32, #tpu.memory_space<vmem>>, vector<1x8x128xf32>
      %245 = vector.shape_cast %244 : vector<1x8x128xf32> to vector<8x128xf32>
      %246 = vector.shape_cast %242 : vector<8x128xf32> to vector<1x8x128xf32>
      tpu.vector_store %arg6[%243, %c0_87, %c0_88], %246 {strides = array<i32>} : memref<8x8x128xf32, #tpu.memory_space<vmem>>, vector<1x8x128xf32>,
      %c4_i32 = arith.constant 4 : i32
      %c1_i32_89 = arith.constant 1 : i32
      %247 = arith.subi %c1_i32_89, %arg0 : i32
      %248 = arith.muli %c4_i32, %247 : i32
      %c7_i32_90 = arith.constant 7 : i32
      %249 = arith.subi %c7_i32_90, %c4_i32 : i32
      %250 = arith.muli %249, %arg0 : i32
      %251 = arith.addi %248, %250 : i32
      %252 = arith.addi %8, %251 : i32
      %c0_91 = arith.constant 0 : index
      %c0_92 = arith.constant 0 : index
      %253 = vector.load %arg7[%c0_91, %c0_92] : memref<8x128xf32, #tpu.memory_space<vmem>>, vector<8x128xf32>
      %c0_93 = arith.constant 0 : index
      %c0_94 = arith.constant 0 : index
      %254 = vector.load %arg8[%c0_93, %c0_94] : memref<8x128xf32, #tpu.memory_space<vmem>>, vector<8x128xf32>
      %c0_95 = arith.constant 0 : index
      %255 = arith.index_cast %251 : i32 to index
      %c0_96 = arith.constant 0 : index
      %c0_97 = arith.constant 0 : index
      %256 = vector.load %arg4[%c0_95, %255, %c0_96, %c0_97] : memref<1x8x8x512xf32, #tpu.memory_space<vmem>>, vector<1x1x8x512xf32>
      %257 = vector.shape_cast %256 : vector<1x1x8x512xf32> to vector<8x512xf32>
      %258 = arith.truncf %253 : vector<8x128xf32> to vector<8x128xbf16>
      %cst_98 = arith.constant dense<0.000000e+00> : vector<8x512xf32>
      %259 = tpu.matmul %258, %18, %cst_98 {dimension_numbers = #tpu.dot_dimension_numbers<[1], [0], [0], [1], [0, 0, 1, 1], [], []>} : vector<8x128xbf16>, vector<128x512xbf16>, vector<8x512xf32> -> vector<8x512xf32>
      %260 = arith.addf %257, %259 : vector<8x512xf32>
      %261 = vector.extract_strided_slice %260 {offsets = [0, 0], sizes = [8, 128], strides = [1, 1]} : vector<8x512xf32> to vector<8x128xf32>
      %262 = arith.negf %261 : vector<8x128xf32>
      %263 = math.exp %262 : vector<8x128xf32>
      %cst_99 = arith.constant 1.000000e+00 : f32
      %264 = vector.broadcast %cst_99 : f32 to vector<8x128xf32>
      %265 = arith.addf %264, %263 : vector<8x128xf32>
      %266 = arith.divf %264, %265 : vector<8x128xf32>
      %267 = vector.extract_strided_slice %260 {offsets = [0, 128], sizes = [8, 128], strides = [1, 1]} : vector<8x512xf32> to vector<8x128xf32>
      %268 = arith.negf %267 : vector<8x128xf32>
      %269 = math.exp %268 : vector<8x128xf32>
      %cst_100 = arith.constant 1.000000e+00 : f32
      %270 = vector.broadcast %cst_100 : f32 to vector<8x128xf32>
      %271 = arith.addf %270, %269 : vector<8x128xf32>
      %272 = arith.divf %270, %271 : vector<8x128xf32>
      %273 = vector.extract_strided_slice %260 {offsets = [0, 256], sizes = [8, 128], strides = [1, 1]} : vector<8x512xf32> to vector<8x128xf32>
      %274 = math.tanh %273 : vector<8x128xf32>
      %275 = vector.extract_strided_slice %260 {offsets = [0, 384], sizes = [8, 128], strides = [1, 1]} : vector<8x512xf32> to vector<8x128xf32>
      %276 = arith.negf %275 : vector<8x128xf32>
      %277 = math.exp %276 : vector<8x128xf32>
      %cst_101 = arith.constant 1.000000e+00 : f32
      %278 = vector.broadcast %cst_101 : f32 to vector<8x128xf32>
      %279 = arith.addf %278, %277 : vector<8x128xf32>
      %280 = arith.divf %278, %279 : vector<8x128xf32>
      %281 = arith.mulf %272, %254 : vector<8x128xf32>
      %282 = arith.mulf %266, %274 : vector<8x128xf32>
      %283 = arith.addf %281, %282 : vector<8x128xf32>
      %284 = math.tanh %283 : vector<8x128xf32>
      %285 = arith.mulf %280, %284 : vector<8x128xf32>
      %286 = vector.broadcast %252 : i32 to vector<8x1xi32>
      %287 = arith.cmpi slt, %286, %16 : vector<8x1xi32>
      %288 = vector.shape_cast %287 : vector<8x1xi1> to vector<8x1xi1>
      %289 = vector.broadcast %288 : vector<8x1xi1> to vector<8x128xi1>
      %290 = arith.select %289, %285, %253 : vector<8x128xi1>, vector<8x128xf32>
      %c0_102 = arith.constant 0 : index
      %c0_103 = arith.constant 0 : index
      %291 = vector.load %arg7[%c0_102, %c0_103] : memref<8x128xf32, #tpu.memory_space<vmem>>, vector<8x128xf32>
      tpu.vector_store %arg7[%c0_102, %c0_103], %290 {strides = array<i32>} : memref<8x128xf32, #tpu.memory_space<vmem>>, vector<8x128xf32>,
      %292 = vector.shape_cast %287 : vector<8x1xi1> to vector<8x1xi1>
      %293 = vector.broadcast %292 : vector<8x1xi1> to vector<8x128xi1>
      %294 = arith.select %293, %283, %254 : vector<8x128xi1>, vector<8x128xf32>
      %c0_104 = arith.constant 0 : index
      %c0_105 = arith.constant 0 : index
      %295 = vector.load %arg8[%c0_104, %c0_105] : memref<8x128xf32, #tpu.memory_space<vmem>>, vector<8x128xf32>
      tpu.vector_store %arg8[%c0_104, %c0_105], %294 {strides = array<i32>} : memref<8x128xf32, #tpu.memory_space<vmem>>, vector<8x128xf32>,
      %cst_106 = arith.constant 0.000000e+00 : f32
      %296 = vector.shape_cast %287 : vector<8x1xi1> to vector<8x1xi1>
      %297 = vector.broadcast %296 : vector<8x1xi1> to vector<8x128xi1>
      %298 = vector.broadcast %cst_106 : f32 to vector<8x128xf32>
      %299 = arith.select %297, %285, %298 : vector<8x128xi1>, vector<8x128xf32>
      %300 = arith.index_cast %251 : i32 to index
      %c0_107 = arith.constant 0 : index
      %c0_108 = arith.constant 0 : index
      %301 = vector.load %arg6[%300, %c0_107, %c0_108] : memref<8x8x128xf32, #tpu.memory_space<vmem>>, vector<1x8x128xf32>
      %302 = vector.shape_cast %301 : vector<1x8x128xf32> to vector<8x128xf32>
      %303 = vector.shape_cast %299 : vector<8x128xf32> to vector<1x8x128xf32>
      tpu.vector_store %arg6[%300, %c0_107, %c0_108], %303 {strides = array<i32>} : memref<8x8x128xf32, #tpu.memory_space<vmem>>, vector<1x8x128xf32>,
      %c5_i32 = arith.constant 5 : i32
      %c1_i32_109 = arith.constant 1 : i32
      %304 = arith.subi %c1_i32_109, %arg0 : i32
      %305 = arith.muli %c5_i32, %304 : i32
      %c7_i32_110 = arith.constant 7 : i32
      %306 = arith.subi %c7_i32_110, %c5_i32 : i32
      %307 = arith.muli %306, %arg0 : i32
      %308 = arith.addi %305, %307 : i32
      %309 = arith.addi %8, %308 : i32
      %c0_111 = arith.constant 0 : index
      %c0_112 = arith.constant 0 : index
      %310 = vector.load %arg7[%c0_111, %c0_112] : memref<8x128xf32, #tpu.memory_space<vmem>>, vector<8x128xf32>
      %c0_113 = arith.constant 0 : index
      %c0_114 = arith.constant 0 : index
      %311 = vector.load %arg8[%c0_113, %c0_114] : memref<8x128xf32, #tpu.memory_space<vmem>>, vector<8x128xf32>
      %c0_115 = arith.constant 0 : index
      %312 = arith.index_cast %308 : i32 to index
      %c0_116 = arith.constant 0 : index
      %c0_117 = arith.constant 0 : index
      %313 = vector.load %arg4[%c0_115, %312, %c0_116, %c0_117] : memref<1x8x8x512xf32, #tpu.memory_space<vmem>>, vector<1x1x8x512xf32>
      %314 = vector.shape_cast %313 : vector<1x1x8x512xf32> to vector<8x512xf32>
      %315 = arith.truncf %310 : vector<8x128xf32> to vector<8x128xbf16>
      %cst_118 = arith.constant dense<0.000000e+00> : vector<8x512xf32>
      %316 = tpu.matmul %315, %18, %cst_118 {dimension_numbers = #tpu.dot_dimension_numbers<[1], [0], [0], [1], [0, 0, 1, 1], [], []>} : vector<8x128xbf16>, vector<128x512xbf16>, vector<8x512xf32> -> vector<8x512xf32>
      %317 = arith.addf %314, %316 : vector<8x512xf32>
      %318 = vector.extract_strided_slice %317 {offsets = [0, 0], sizes = [8, 128], strides = [1, 1]} : vector<8x512xf32> to vector<8x128xf32>
      %319 = arith.negf %318 : vector<8x128xf32>
      %320 = math.exp %319 : vector<8x128xf32>
      %cst_119 = arith.constant 1.000000e+00 : f32
      %321 = vector.broadcast %cst_119 : f32 to vector<8x128xf32>
      %322 = arith.addf %321, %320 : vector<8x128xf32>
      %323 = arith.divf %321, %322 : vector<8x128xf32>
      %324 = vector.extract_strided_slice %317 {offsets = [0, 128], sizes = [8, 128], strides = [1, 1]} : vector<8x512xf32> to vector<8x128xf32>
      %325 = arith.negf %324 : vector<8x128xf32>
      %326 = math.exp %325 : vector<8x128xf32>
      %cst_120 = arith.constant 1.000000e+00 : f32
      %327 = vector.broadcast %cst_120 : f32 to vector<8x128xf32>
      %328 = arith.addf %327, %326 : vector<8x128xf32>
      %329 = arith.divf %327, %328 : vector<8x128xf32>
      %330 = vector.extract_strided_slice %317 {offsets = [0, 256], sizes = [8, 128], strides = [1, 1]} : vector<8x512xf32> to vector<8x128xf32>
      %331 = math.tanh %330 : vector<8x128xf32>
      %332 = vector.extract_strided_slice %317 {offsets = [0, 384], sizes = [8, 128], strides = [1, 1]} : vector<8x512xf32> to vector<8x128xf32>
      %333 = arith.negf %332 : vector<8x128xf32>
      %334 = math.exp %333 : vector<8x128xf32>
      %cst_121 = arith.constant 1.000000e+00 : f32
      %335 = vector.broadcast %cst_121 : f32 to vector<8x128xf32>
      %336 = arith.addf %335, %334 : vector<8x128xf32>
      %337 = arith.divf %335, %336 : vector<8x128xf32>
      %338 = arith.mulf %329, %311 : vector<8x128xf32>
      %339 = arith.mulf %323, %331 : vector<8x128xf32>
      %340 = arith.addf %338, %339 : vector<8x128xf32>
      %341 = math.tanh %340 : vector<8x128xf32>
      %342 = arith.mulf %337, %341 : vector<8x128xf32>
      %343 = vector.broadcast %309 : i32 to vector<8x1xi32>
      %344 = arith.cmpi slt, %343, %16 : vector<8x1xi32>
      %345 = vector.shape_cast %344 : vector<8x1xi1> to vector<8x1xi1>
      %346 = vector.broadcast %345 : vector<8x1xi1> to vector<8x128xi1>
      %347 = arith.select %346, %342, %310 : vector<8x128xi1>, vector<8x128xf32>
      %c0_122 = arith.constant 0 : index
      %c0_123 = arith.constant 0 : index
      %348 = vector.load %arg7[%c0_122, %c0_123] : memref<8x128xf32, #tpu.memory_space<vmem>>, vector<8x128xf32>
      tpu.vector_store %arg7[%c0_122, %c0_123], %347 {strides = array<i32>} : memref<8x128xf32, #tpu.memory_space<vmem>>, vector<8x128xf32>,
      %349 = vector.shape_cast %344 : vector<8x1xi1> to vector<8x1xi1>
      %350 = vector.broadcast %349 : vector<8x1xi1> to vector<8x128xi1>
      %351 = arith.select %350, %340, %311 : vector<8x128xi1>, vector<8x128xf32>
      %c0_124 = arith.constant 0 : index
      %c0_125 = arith.constant 0 : index
      %352 = vector.load %arg8[%c0_124, %c0_125] : memref<8x128xf32, #tpu.memory_space<vmem>>, vector<8x128xf32>
      tpu.vector_store %arg8[%c0_124, %c0_125], %351 {strides = array<i32>} : memref<8x128xf32, #tpu.memory_space<vmem>>, vector<8x128xf32>,
      %cst_126 = arith.constant 0.000000e+00 : f32
      %353 = vector.shape_cast %344 : vector<8x1xi1> to vector<8x1xi1>
      %354 = vector.broadcast %353 : vector<8x1xi1> to vector<8x128xi1>
      %355 = vector.broadcast %cst_126 : f32 to vector<8x128xf32>
      %356 = arith.select %354, %342, %355 : vector<8x128xi1>, vector<8x128xf32>
      %357 = arith.index_cast %308 : i32 to index
      %c0_127 = arith.constant 0 : index
      %c0_128 = arith.constant 0 : index
      %358 = vector.load %arg6[%357, %c0_127, %c0_128] : memref<8x8x128xf32, #tpu.memory_space<vmem>>, vector<1x8x128xf32>
      %359 = vector.shape_cast %358 : vector<1x8x128xf32> to vector<8x128xf32>
      %360 = vector.shape_cast %356 : vector<8x128xf32> to vector<1x8x128xf32>
      tpu.vector_store %arg6[%357, %c0_127, %c0_128], %360 {strides = array<i32>} : memref<8x8x128xf32, #tpu.memory_space<vmem>>, vector<1x8x128xf32>,
      %c6_i32 = arith.constant 6 : i32
      %c1_i32_129 = arith.constant 1 : i32
      %361 = arith.subi %c1_i32_129, %arg0 : i32
      %362 = arith.muli %c6_i32, %361 : i32
      %c7_i32_130 = arith.constant 7 : i32
      %363 = arith.subi %c7_i32_130, %c6_i32 : i32
      %364 = arith.muli %363, %arg0 : i32
      %365 = arith.addi %362, %364 : i32
      %366 = arith.addi %8, %365 : i32
      %c0_131 = arith.constant 0 : index
      %c0_132 = arith.constant 0 : index
      %367 = vector.load %arg7[%c0_131, %c0_132] : memref<8x128xf32, #tpu.memory_space<vmem>>, vector<8x128xf32>
      %c0_133 = arith.constant 0 : index
      %c0_134 = arith.constant 0 : index
      %368 = vector.load %arg8[%c0_133, %c0_134] : memref<8x128xf32, #tpu.memory_space<vmem>>, vector<8x128xf32>
      %c0_135 = arith.constant 0 : index
      %369 = arith.index_cast %365 : i32 to index
      %c0_136 = arith.constant 0 : index
      %c0_137 = arith.constant 0 : index
      %370 = vector.load %arg4[%c0_135, %369, %c0_136, %c0_137] : memref<1x8x8x512xf32, #tpu.memory_space<vmem>>, vector<1x1x8x512xf32>
      %371 = vector.shape_cast %370 : vector<1x1x8x512xf32> to vector<8x512xf32>
      %372 = arith.truncf %367 : vector<8x128xf32> to vector<8x128xbf16>
      %cst_138 = arith.constant dense<0.000000e+00> : vector<8x512xf32>
      %373 = tpu.matmul %372, %18, %cst_138 {dimension_numbers = #tpu.dot_dimension_numbers<[1], [0], [0], [1], [0, 0, 1, 1], [], []>} : vector<8x128xbf16>, vector<128x512xbf16>, vector<8x512xf32> -> vector<8x512xf32>
      %374 = arith.addf %371, %373 : vector<8x512xf32>
      %375 = vector.extract_strided_slice %374 {offsets = [0, 0], sizes = [8, 128], strides = [1, 1]} : vector<8x512xf32> to vector<8x128xf32>
      %376 = arith.negf %375 : vector<8x128xf32>
      %377 = math.exp %376 : vector<8x128xf32>
      %cst_139 = arith.constant 1.000000e+00 : f32
      %378 = vector.broadcast %cst_139 : f32 to vector<8x128xf32>
      %379 = arith.addf %378, %377 : vector<8x128xf32>
      %380 = arith.divf %378, %379 : vector<8x128xf32>
      %381 = vector.extract_strided_slice %374 {offsets = [0, 128], sizes = [8, 128], strides = [1, 1]} : vector<8x512xf32> to vector<8x128xf32>
      %382 = arith.negf %381 : vector<8x128xf32>
      %383 = math.exp %382 : vector<8x128xf32>
      %cst_140 = arith.constant 1.000000e+00 : f32
      %384 = vector.broadcast %cst_140 : f32 to vector<8x128xf32>
      %385 = arith.addf %384, %383 : vector<8x128xf32>
      %386 = arith.divf %384, %385 : vector<8x128xf32>
      %387 = vector.extract_strided_slice %374 {offsets = [0, 256], sizes = [8, 128], strides = [1, 1]} : vector<8x512xf32> to vector<8x128xf32>
      %388 = math.tanh %387 : vector<8x128xf32>
      %389 = vector.extract_strided_slice %374 {offsets = [0, 384], sizes = [8, 128], strides = [1, 1]} : vector<8x512xf32> to vector<8x128xf32>
      %390 = arith.negf %389 : vector<8x128xf32>
      %391 = math.exp %390 : vector<8x128xf32>
      %cst_141 = arith.constant 1.000000e+00 : f32
      %392 = vector.broadcast %cst_141 : f32 to vector<8x128xf32>
      %393 = arith.addf %392, %391 : vector<8x128xf32>
      %394 = arith.divf %392, %393 : vector<8x128xf32>
      %395 = arith.mulf %386, %368 : vector<8x128xf32>
      %396 = arith.mulf %380, %388 : vector<8x128xf32>
      %397 = arith.addf %395, %396 : vector<8x128xf32>
      %398 = math.tanh %397 : vector<8x128xf32>
      %399 = arith.mulf %394, %398 : vector<8x128xf32>
      %400 = vector.broadcast %366 : i32 to vector<8x1xi32>
      %401 = arith.cmpi slt, %400, %16 : vector<8x1xi32>
      %402 = vector.shape_cast %401 : vector<8x1xi1> to vector<8x1xi1>
      %403 = vector.broadcast %402 : vector<8x1xi1> to vector<8x128xi1>
      %404 = arith.select %403, %399, %367 : vector<8x128xi1>, vector<8x128xf32>
      %c0_142 = arith.constant 0 : index
      %c0_143 = arith.constant 0 : index
      %405 = vector.load %arg7[%c0_142, %c0_143] : memref<8x128xf32, #tpu.memory_space<vmem>>, vector<8x128xf32>
      tpu.vector_store %arg7[%c0_142, %c0_143], %404 {strides = array<i32>} : memref<8x128xf32, #tpu.memory_space<vmem>>, vector<8x128xf32>,
      %406 = vector.shape_cast %401 : vector<8x1xi1> to vector<8x1xi1>
      %407 = vector.broadcast %406 : vector<8x1xi1> to vector<8x128xi1>
      %408 = arith.select %407, %397, %368 : vector<8x128xi1>, vector<8x128xf32>
      %c0_144 = arith.constant 0 : index
      %c0_145 = arith.constant 0 : index
      %409 = vector.load %arg8[%c0_144, %c0_145] : memref<8x128xf32, #tpu.memory_space<vmem>>, vector<8x128xf32>
      tpu.vector_store %arg8[%c0_144, %c0_145], %408 {strides = array<i32>} : memref<8x128xf32, #tpu.memory_space<vmem>>, vector<8x128xf32>,
      %cst_146 = arith.constant 0.000000e+00 : f32
      %410 = vector.shape_cast %401 : vector<8x1xi1> to vector<8x1xi1>
      %411 = vector.broadcast %410 : vector<8x1xi1> to vector<8x128xi1>
      %412 = vector.broadcast %cst_146 : f32 to vector<8x128xf32>
      %413 = arith.select %411, %399, %412 : vector<8x128xi1>, vector<8x128xf32>
      %414 = arith.index_cast %365 : i32 to index
      %c0_147 = arith.constant 0 : index
      %c0_148 = arith.constant 0 : index
      %415 = vector.load %arg6[%414, %c0_147, %c0_148] : memref<8x8x128xf32, #tpu.memory_space<vmem>>, vector<1x8x128xf32>
      %416 = vector.shape_cast %415 : vector<1x8x128xf32> to vector<8x128xf32>
      %417 = vector.shape_cast %413 : vector<8x128xf32> to vector<1x8x128xf32>
      tpu.vector_store %arg6[%414, %c0_147, %c0_148], %417 {strides = array<i32>} : memref<8x8x128xf32, #tpu.memory_space<vmem>>, vector<1x8x128xf32>,
      %c7_i32_149 = arith.constant 7 : i32
      %c1_i32_150 = arith.constant 1 : i32
      %418 = arith.subi %c1_i32_150, %arg0 : i32
      %419 = arith.muli %c7_i32_149, %418 : i32
      %c7_i32_151 = arith.constant 7 : i32
      %420 = arith.subi %c7_i32_151, %c7_i32_149 : i32
      %421 = arith.muli %420, %arg0 : i32
      %422 = arith.addi %419, %421 : i32
      %423 = arith.addi %8, %422 : i32
      %c0_152 = arith.constant 0 : index
      %c0_153 = arith.constant 0 : index
      %424 = vector.load %arg7[%c0_152, %c0_153] : memref<8x128xf32, #tpu.memory_space<vmem>>, vector<8x128xf32>
      %c0_154 = arith.constant 0 : index
      %c0_155 = arith.constant 0 : index
      %425 = vector.load %arg8[%c0_154, %c0_155] : memref<8x128xf32, #tpu.memory_space<vmem>>, vector<8x128xf32>
      %c0_156 = arith.constant 0 : index
      %426 = arith.index_cast %422 : i32 to index
      %c0_157 = arith.constant 0 : index
      %c0_158 = arith.constant 0 : index
      %427 = vector.load %arg4[%c0_156, %426, %c0_157, %c0_158] : memref<1x8x8x512xf32, #tpu.memory_space<vmem>>, vector<1x1x8x512xf32>
      %428 = vector.shape_cast %427 : vector<1x1x8x512xf32> to vector<8x512xf32>
      %429 = arith.truncf %424 : vector<8x128xf32> to vector<8x128xbf16>
      %cst_159 = arith.constant dense<0.000000e+00> : vector<8x512xf32>
      %430 = tpu.matmul %429, %18, %cst_159 {dimension_numbers = #tpu.dot_dimension_numbers<[1], [0], [0], [1], [0, 0, 1, 1], [], []>} : vector<8x128xbf16>, vector<128x512xbf16>, vector<8x512xf32> -> vector<8x512xf32>
      %431 = arith.addf %428, %430 : vector<8x512xf32>
      %432 = vector.extract_strided_slice %431 {offsets = [0, 0], sizes = [8, 128], strides = [1, 1]} : vector<8x512xf32> to vector<8x128xf32>
      %433 = arith.negf %432 : vector<8x128xf32>
      %434 = math.exp %433 : vector<8x128xf32>
      %cst_160 = arith.constant 1.000000e+00 : f32
      %435 = vector.broadcast %cst_160 : f32 to vector<8x128xf32>
      %436 = arith.addf %435, %434 : vector<8x128xf32>
      %437 = arith.divf %435, %436 : vector<8x128xf32>
      %438 = vector.extract_strided_slice %431 {offsets = [0, 128], sizes = [8, 128], strides = [1, 1]} : vector<8x512xf32> to vector<8x128xf32>
      %439 = arith.negf %438 : vector<8x128xf32>
      %440 = math.exp %439 : vector<8x128xf32>
      %cst_161 = arith.constant 1.000000e+00 : f32
      %441 = vector.broadcast %cst_161 : f32 to vector<8x128xf32>
      %442 = arith.addf %441, %440 : vector<8x128xf32>
      %443 = arith.divf %441, %442 : vector<8x128xf32>
      %444 = vector.extract_strided_slice %431 {offsets = [0, 256], sizes = [8, 128], strides = [1, 1]} : vector<8x512xf32> to vector<8x128xf32>
      %445 = math.tanh %444 : vector<8x128xf32>
      %446 = vector.extract_strided_slice %431 {offsets = [0, 384], sizes = [8, 128], strides = [1, 1]} : vector<8x512xf32> to vector<8x128xf32>
      %447 = arith.negf %446 : vector<8x128xf32>
      %448 = math.exp %447 : vector<8x128xf32>
      %cst_162 = arith.constant 1.000000e+00 : f32
      %449 = vector.broadcast %cst_162 : f32 to vector<8x128xf32>
      %450 = arith.addf %449, %448 : vector<8x128xf32>
      %451 = arith.divf %449, %450 : vector<8x128xf32>
      %452 = arith.mulf %443, %425 : vector<8x128xf32>
      %453 = arith.mulf %437, %445 : vector<8x128xf32>
      %454 = arith.addf %452, %453 : vector<8x128xf32>
      %455 = math.tanh %454 : vector<8x128xf32>
      %456 = arith.mulf %451, %455 : vector<8x128xf32>
      %457 = vector.broadcast %423 : i32 to vector<8x1xi32>
      %458 = arith.cmpi slt, %457, %16 : vector<8x1xi32>
      %459 = vector.shape_cast %458 : vector<8x1xi1> to vector<8x1xi1>
      %460 = vector.broadcast %459 : vector<8x1xi1> to vector<8x128xi1>
      %461 = arith.select %460, %456, %424 : vector<8x128xi1>, vector<8x128xf32>
      %c0_163 = arith.constant 0 : index
      %c0_164 = arith.constant 0 : index
      %462 = vector.load %arg7[%c0_163, %c0_164] : memref<8x128xf32, #tpu.memory_space<vmem>>, vector<8x128xf32>
      tpu.vector_store %arg7[%c0_163, %c0_164], %461 {strides = array<i32>} : memref<8x128xf32, #tpu.memory_space<vmem>>, vector<8x128xf32>,
      %463 = vector.shape_cast %458 : vector<8x1xi1> to vector<8x1xi1>
      %464 = vector.broadcast %463 : vector<8x1xi1> to vector<8x128xi1>
      %465 = arith.select %464, %454, %425 : vector<8x128xi1>, vector<8x128xf32>
      %c0_165 = arith.constant 0 : index
      %c0_166 = arith.constant 0 : index
      %466 = vector.load %arg8[%c0_165, %c0_166] : memref<8x128xf32, #tpu.memory_space<vmem>>, vector<8x128xf32>
      tpu.vector_store %arg8[%c0_165, %c0_166], %465 {strides = array<i32>} : memref<8x128xf32, #tpu.memory_space<vmem>>, vector<8x128xf32>,
      %cst_167 = arith.constant 0.000000e+00 : f32
      %467 = vector.shape_cast %458 : vector<8x1xi1> to vector<8x1xi1>
      %468 = vector.broadcast %467 : vector<8x1xi1> to vector<8x128xi1>
      %469 = vector.broadcast %cst_167 : f32 to vector<8x128xf32>
      %470 = arith.select %468, %456, %469 : vector<8x128xi1>, vector<8x128xf32>
      %471 = arith.index_cast %422 : i32 to index
      %c0_168 = arith.constant 0 : index
      %c0_169 = arith.constant 0 : index
      %472 = vector.load %arg6[%471, %c0_168, %c0_169] : memref<8x8x128xf32, #tpu.memory_space<vmem>>, vector<1x8x128xf32>
      %473 = vector.shape_cast %472 : vector<1x8x128xf32> to vector<8x128xf32>
      %474 = vector.shape_cast %470 : vector<8x128xf32> to vector<1x8x128xf32>
      tpu.vector_store %arg6[%471, %c0_168, %c0_169], %474 {strides = array<i32>} : memref<8x8x128xf32, #tpu.memory_space<vmem>>, vector<1x8x128xf32>,
      %c8_i32_170 = arith.constant 8 : i32
    } else {
    }
    return
  }
  func.func @transform_0(%arg0: i32, %arg1: i32, %arg2: memref<1xi32, #tpu.memory_space<smem>>) -> (i32, i32) {
    %c0_i32 = arith.constant 0 : i32
    %c0_i32_0 = arith.constant 0 : i32
    %c0_i32_1 = arith.constant 0 : i32
    return %c0_i32, %c0_i32_0 : i32, i32
  }
  func.func @transform_1(%arg0: i32, %arg1: i32, %arg2: memref<1xi32, #tpu.memory_space<smem>>) -> (i32, i32, i32, i32) {
    %c1_i32 = arith.constant 1 : i32
    %0 = arith.subi %c1_i32, %arg0 : i32
    %1 = arith.muli %arg1, %0 : i32
    %c0_i32 = arith.constant 0 : i32
    %2 = arith.subi %c0_i32, %arg1 : i32
    %3 = arith.muli %2, %arg0 : i32
    %4 = arith.addi %1, %3 : i32
    %c0_i32_0 = arith.constant 0 : i32
    %c0_i32_1 = arith.constant 0 : i32
    %c0_i32_2 = arith.constant 0 : i32
    return %arg0, %4, %c0_i32_0, %c0_i32_1 : i32, i32, i32, i32
  }
  func.func @transform_2(%arg0: i32, %arg1: i32, %arg2: memref<1xi32, #tpu.memory_space<smem>>) -> (i32, i32, i32) {
    %c0_i32 = arith.constant 0 : i32
    %c0_i32_0 = arith.constant 0 : i32
    %c0_i32_1 = arith.constant 0 : i32
    return %arg0, %c0_i32, %c0_i32_0 : i32, i32, i32
  }
  func.func @transform_3(%arg0: i32, %arg1: i32, %arg2: memref<1xi32, #tpu.memory_space<smem>>) -> (i32, i32, i32) {
    %c1_i32 = arith.constant 1 : i32
    %0 = arith.subi %c1_i32, %arg0 : i32
    %1 = arith.muli %arg1, %0 : i32
    %c0_i32 = arith.constant 0 : i32
    %2 = arith.subi %c0_i32, %arg1 : i32
    %3 = arith.muli %2, %arg0 : i32
    %4 = arith.addi %1, %3 : i32
    %c0_i32_0 = arith.constant 0 : i32
    %c0_i32_1 = arith.constant 0 : i32
    return %4, %c0_i32_0, %arg0 : i32, i32, i32
  }
}

</mosaic_0001>

<llo_original>
// kernel: tpu_custom_call.1
$region0: #{tpu_custom_call.1}
  #allocation0 [shape = 'u32[]', space=smem, size = 0x4, offset = 0x4, fixed_abs, tag = 'smem constant byte address 0x4 - core index']
  #allocation1 [shape = 'u32[144,128]{1,0:T(1,128)}', space=vmem, size = 0x12000, scoped, tag = 'internal scratch']
  #allocation2 [shape = 'f32[8,128]{1,0:T(8,128)}', space=vmem, size = 0x1000, scoped, tag = 'scratch operand']
  #allocation3 [shape = 'f32[8,128]{1,0:T(8,128)}', space=vmem, size = 0x1000, scoped, tag = 'scratch operand']
  #allocation4 [shape = 's32[1]{0}', space=sflag, size = 0x4, scoped, tag = 'scoped memory for tpu_custom_call.1']
  #allocation5 [shape = 's32[1]{0:T(128)S(6)}', space=smem, size = 0x200, scoped, tag = 'prefetched SMEM operand 0']
  %s0 = inlined_call_operand.<no memory space> [shape: s32[1], index: 0, kind: input, shape index: {}]
  %s1 = inlined_call_operand.vmem [shape: s32[8,1], index: 1, kind: input, shape index: {}]
  %s2 = inlined_call_operand.hbm [shape: f32[2,8,8,512], index: 2, kind: input, shape index: {}]
  %s3 = inlined_call_operand.hbm [shape: bf16[2,128,512], index: 3, kind: input, shape index: {}]
  %s4 = inlined_call_operand.hbm [shape: f32[8,8,256], index: 4, kind: output, shape index: {}]
  %s5 = sld [smem:[#allocation0]]
  $region65: #{tpu_custom_call.1} parent=0
    _
  %s7 = ssub.s32 1, %s5
  %s8 = scalar_select 0, %s7, %s5
  %9 = sst [smem:[#allocation5]] %s0
  $region1: #{tpu_custom_call.1} parent=0
    #allocation6 [shape = 'u8[262144]{0}', space=vmem, size = 0x40000, scoped, tag = 'input window, operand 2']
    #allocation7 [shape = 's32[2]{0}', space=sflag, size = 0x8, scoped, tag = 'scoped memory for tpu_custom_call.1']
    #allocation8 [shape = 's32[2]{0}', space=sflag, size = 0x8, scoped, tag = 'scoped memory for tpu_custom_call.1']
    #allocation9 [shape = 'u8[262144]{0}', space=vmem, size = 0x40000, scoped, tag = 'input window, operand 3']
    #allocation10 [shape = 's32[2]{0}', space=sflag, size = 0x8, scoped, tag = 'scoped memory for tpu_custom_call.1']
    #allocation11 [shape = 'u8[65536]{0}', space=vmem, size = 0x10000, scoped, tag = 'output window, operand 0']
    %10 = vsyncpa [#allocation7], 0
    %s11 = scalar_lea.sflag [#allocation7], 1
    %12 = vsyncpa %s11, 0
    %13 = vsyncpa [#allocation10], 0
    %s14 = scalar_lea.sflag [#allocation10], 1
    %15 = vsyncpa %s14, 0
    %16 = vsyncpa [#allocation8], 0
    %s17 = scalar_lea.sflag [#allocation8], 1
    %18 = vsyncpa %s17, 0
    loop: start=0, step=1, limit=4
    $region2: #{tpu_custom_call.1} parent=1 // loop_pre_header
      _
    $region3: #{tpu_custom_call.1} parent=1 // loop_header
      %s20 = sphi 0, %s24
      %p21 = scmp.ge.s32.totalorder %s20, 4
      %s27 = sphi 0, %s39
      %s28 = sphi 0, %s35
      %s29 = sphi 0, %s27
      %s30 = sphi 0, %s28
      %s31 = sphi 0, %s29
      %s32 = sphi 0, %s30
      %s40 = sphi 0, %s40
      %s42 = sphi 0, %s40
      %s43 = sphi 0, %s42
      %s57 = sphi 0, %s43
      %s75 = sphi 0, %s77
      %s78 = sphi 0, %s75
      %s79 = sphi 0, %s78
      %s95 = sphi 0, %s79
      %s101 = sphi 0, %s103
      %s104 = sphi 0, %s101
      %s105 = sphi 0, %s104
      %s121 = sphi 0, %s105
      %s139 = sphi 0, %s141
      %s142 = sphi 0, %s139
      %s143 = sphi 0, %s142
      %s159 = sphi 0, %s143
    $region4: #{tpu_custom_call.1} parent=1 // loop_header_branch
      %23 = sbr.rel (%p21) target = $region8
    $region5: #{tpu_custom_call.1} parent=1 // loop_body
      %s25 = ssub.s32 %s20, 1
      %s26 = ssub.s32 %s20, 2
      %s33 = sadd.s32 1, %s28
      %p34 = scmp.ge.s32.totalorder %s33, 1
      %s35 = scalar_select %p34, 0, %s33
      %s36 = sadd.s32 1, %s27
      %s37 = scalar_select %p34, %s36, %s27
      %p38 = scmp.ge.s32.totalorder %s37, 2
      %s39 = scalar_select %p38, 0, %s37
      %s41 = sadd.s32 %s40, 1
      %p44 = scmp.eq.s32.totalorder %s20, 1
      %p45 = scmp.ne.s32.totalorder %s40, %s42
      %p46 = scmp.eq.s32.totalorder %s20, 0
      %p47 = por %p45, %p46
      %p48 = scmp.ne.s32.totalorder %s40, %s42
      %p49 = scmp.eq.s32.totalorder %s25, 1
      %p50 = por %p48, %p49
      %p51 = scmp.ne.s32.totalorder %s42, %s43
      %p52 = scmp.eq.s32.totalorder %s25, 0
      %p53 = por %p51, %p52
      %p54 = scmp.ne.s32.totalorder %s42, %s43
      %p55 = scmp.eq.s32.totalorder %s26, 1
      %p56 = por %p54, %p55
      %p58 = scmp.ne.s32.totalorder %s43, %s57
      %p59 = scmp.eq.s32.totalorder %s26, 0
      %p60 = por %p58, %p59
      %s61 = ssub.s32 1, %s27
      %s62 = smul.u32 %s28, %s61
      %s63 = ssub.s32 0, %s28
      %s64 = smul.u32 %s63, %s27
      %s65 = sadd.s32 %s62, %s64
      %s66 = ssub.s32 1, %s39
      %s67 = smul.u32 %s35, %s66
      %s68 = ssub.s32 0, %s35
      %s69 = smul.u32 %s68, %s39
      %s70 = sadd.s32 %s67, %s69
      %s71 = ssub.s32 %s27, %s39
      %s72 = ssub.s32 %s65, %s70
      %s73 = sor.u32 %s71, %s72
      %p74 = scmp.eq.s32.totalorder %s73, 0
      %s76 = sadd.s32 %s75, 1
      %s77 = scalar_select %p74, %s75, %s76
      %p80 = pneg %p74
      %p81 = scmp.eq.s32.totalorder %s20, 1
      %p82 = por %p80, %p81
      %p83 = scmp.ne.s32.totalorder %s75, %s78
      %p84 = scmp.eq.s32.totalorder %s20, 0
      %p85 = por %p83, %p84
      %p86 = scmp.ne.s32.totalorder %s75, %s78
      %p87 = scmp.eq.s32.totalorder %s25, 1
      %p88 = por %p86, %p87
      %p89 = scmp.ne.s32.totalorder %s78, %s79
      %p90 = scmp.eq.s32.totalorder %s25, 0
      %p91 = por %p89, %p90
      %p92 = scmp.ne.s32.totalorder %s78, %s79
      %p93 = scmp.eq.s32.totalorder %s26, 1
      %p94 = por %p92, %p93
      %p96 = scmp.ne.s32.totalorder %s79, %s95
      %p97 = scmp.eq.s32.totalorder %s26, 0
      %p98 = por %p96, %p97
      %s99 = ssub.s32 %s27, %s39
      %p100 = scmp.eq.s32.totalorder %s99, 0
      %s102 = sadd.s32 %s101, 1
      %s103 = scalar_select %p100, %s101, %s102
      %p106 = pneg %p100
      %p107 = scmp.eq.s32.totalorder %s20, 1
      %p108 = por %p106, %p107
      %p109 = scmp.ne.s32.totalorder %s101, %s104
      %p110 = scmp.eq.s32.totalorder %s20, 0
      %p111 = por %p109, %p110
      %p112 = scmp.ne.s32.totalorder %s101, %s104
      %p113 = scmp.eq.s32.totalorder %s25, 1
      %p114 = por %p112, %p113
      %p115 = scmp.ne.s32.totalorder %s104, %s105
      %p116 = scmp.eq.s32.totalorder %s25, 0
      %p117 = por %p115, %p116
      %p118 = scmp.ne.s32.totalorder %s104, %s105
      %p119 = scmp.eq.s32.totalorder %s26, 1
      %p120 = por %p118, %p119
      %p122 = scmp.ne.s32.totalorder %s105, %s121
      %p123 = scmp.eq.s32.totalorder %s26, 0
      %p124 = por %p122, %p123
      %s125 = ssub.s32 1, %s27
      %s126 = smul.u32 %s28, %s125
      %s127 = ssub.s32 0, %s28
      %s128 = smul.u32 %s127, %s27
      %s129 = sadd.s32 %s126, %s128
      %s130 = ssub.s32 1, %s39
      %s131 = smul.u32 %s35, %s130
      %s132 = ssub.s32 0, %s35
      %s133 = smul.u32 %s132, %s39
      %s134 = sadd.s32 %s131, %s133
      %s135 = ssub.s32 %s129, %s134
      %s136 = ssub.s32 %s27, %s39
      %s137 = sor.u32 %s135, %s136
      %p138 = scmp.eq.s32.totalorder %s137, 0
      %s140 = sadd.s32 %s139, 1
      %s141 = scalar_select %p138, %s139, %s140
      %p144 = pneg %p138
      %p145 = scmp.eq.s32.totalorder %s20, 1
      %p146 = por %p144, %p145
      %p147 = scmp.ne.s32.totalorder %s139, %s142
      %p148 = scmp.eq.s32.totalorder %s20, 0
      %p149 = por %p147, %p148
      %p150 = scmp.ne.s32.totalorder %s139, %s142
      %p151 = scmp.eq.s32.totalorder %s25, 1
      %p152 = por %p150, %p151
      %p153 = scmp.ne.s32.totalorder %s142, %s143
      %p154 = scmp.eq.s32.totalorder %s25, 0
      %p155 = por %p153, %p154
      %p156 = scmp.ne.s32.totalorder %s142, %s143
      %p157 = scmp.eq.s32.totalorder %s26, 1
      %p158 = por %p156, %p157
      %p160 = scmp.ne.s32.totalorder %s143, %s159
      %p161 = scmp.eq.s32.totalorder %s26, 0
      %p162 = por %p160, %p161
      %p163 = scmp.le.s32.totalorder 1, %s20
      %p164 = scmp.lt.s32.totalorder %s20, 3
      %p165 = pnand %p163, %p164
      %p166 = pneg %p165
      // Predicated region
      $region9: #{tpu_custom_call.1} parent=5 // pred_check
        _
      $region10: #{tpu_custom_call.1} parent=5 // pred_check_branch
        %168 = sbr.rel (%p165) target = $region12
      $region11: #{tpu_custom_call.1} parent=5 // pred_region
        %s169 = ssub.s32 %s20, 1
        // Predicated region
        $region13: #{tpu_custom_call.1} parent=11 // pred_check
          %p170 = pneg %p53
        $region14: #{tpu_custom_call.1} parent=11 // pred_check_branch
          %172 = sbr.rel (%p170) target = $region16
        $region15: #{tpu_custom_call.1} parent=11 // pred_region
          _
        $region16: #{tpu_custom_call.1} parent=11 // pred_fallthru
          _
      $region12: #{tpu_custom_call.1} parent=5 // pred_fallthru
        _
      %p173 = scmp.lt.s32.totalorder %s20, 2
      // Predicated region
      $region17: #{tpu_custom_call.1} parent=5 // pred_check
        %p174 = pneg %p173
      $region18: #{tpu_custom_call.1} parent=5 // pred_check_branch
        %176 = sbr.rel (%p174) target = $region20
      $region19: #{tpu_custom_call.1} parent=5 // pred_region
        // Predicated region
        $region21: #{tpu_custom_call.1} parent=19 // pred_check
          %p177 = pneg %p85
        $region22: #{tpu_custom_call.1} parent=19 // pred_check_branch
          %179 = sbr.rel (%p177) target = $region24
        $region23: #{tpu_custom_call.1} parent=19 // pred_region
          %s180 = sand.u32 %s75, 1
          %s181 = scalar_lea.sflag [#allocation7], %s180
          %s182 = sand.u32 %s75, 1
          %s183 = smul.addr %s182, 256
          %s184 = scalar_lea.vmem [#allocation6], %s183
          %s185 = ssub.s32 1, %s27
          %s186 = smul.u32 %s28, %s185
          %s187 = ssub.s32 0, %s28
          %s188 = smul.u32 %s187, %s27
          %s189 = sadd.s32 %s186, %s188
          %s190 = smul.u32 8, %s189
          %s192 = ssub.s32 4096, 4096
          %193 = vsyncadd %s181, %s192
          %s194 = smul.addr %s190, 4
          %s195 = smul.addr %s27, 32
          %s196 = sadd.s32 %s194, %s195
          %s197 = smul.addr %s196, 128
          %s198 = scalar_lea.hbm %s2, %s197
          %s199 = sshll.u32 %s184, 4
          %s200 = int_to_ptr.vmem [resolvable:$true] %s199
          %205 = dma.hbm_to_vmem [thread:$0]  %s198, 4096, %s200, %s181, 512, 512, 32
        $region24: #{tpu_custom_call.1} parent=19 // pred_fallthru
          _
        // Predicated region
        $region25: #{tpu_custom_call.1} parent=19 // pred_check
          %p206 = pneg %p111
        $region26: #{tpu_custom_call.1} parent=19 // pred_check_branch
          %208 = sbr.rel (%p206) target = $region28
        $region27: #{tpu_custom_call.1} parent=19 // pred_region
          %s209 = sand.u32 %s101, 1
          %s210 = scalar_lea.sflag [#allocation10], %s209
          %s211 = sand.u32 %s101, 1
          %s212 = smul.addr %s211, 256
          %s213 = scalar_lea.vmem [#allocation9], %s212
          %s215 = ssub.s32 4096, 4096
          %216 = vsyncadd %s210, %s215
          %s217 = smul.addr %s27, 64
          %s218 = smul.addr %s217, 64
          %s219 = scalar_lea.hbm %s3, %s218
          %s220 = sshll.u32 %s213, 4
          %s221 = int_to_ptr.vmem [resolvable:$true] %s220
          %226 = dma.hbm_to_vmem [thread:$0]  %s219, 4096, %s221, %s210, 256, 256, 16
        $region28: #{tpu_custom_call.1} parent=19 // pred_fallthru
          _
      $region20: #{tpu_custom_call.1} parent=5 // pred_fallthru
        _
      %p227 = scmp.le.s32.totalorder 1, %s20
      %p228 = scmp.lt.s32.totalorder %s20, 3
      %p229 = pnand %p227, %p228
      %p230 = pneg %p229
      // Predicated region
      $region29: #{tpu_custom_call.1} parent=5 // pred_check
        _
      $region30: #{tpu_custom_call.1} parent=5 // pred_check_branch
        %232 = sbr.rel (%p229) target = $region32
      $region31: #{tpu_custom_call.1} parent=5 // pred_region
        %s233 = ssub.s32 %s20, 1
        %s234 = sand.u32 %s78, 1
        %s235 = scalar_lea.sflag [#allocation7], %s234
        %s236 = sand.u32 %s78, 1
        %s237 = smul.addr %s236, 256
        %s238 = scalar_lea.vmem [#allocation6], %s237
        // Predicated region
        $region33: #{tpu_custom_call.1} parent=31 // pred_check
          %p239 = pneg %p91
        $region34: #{tpu_custom_call.1} parent=31 // pred_check_branch
          %241 = sbr.rel (%p239) target = $region36
        $region35: #{tpu_custom_call.1} parent=31 // pred_region
          %242 = dma.done %s235, 4096
        $region36: #{tpu_custom_call.1} parent=31 // pred_fallthru
          _
        %s243 = sand.u32 %s104, 1
        %s244 = scalar_lea.sflag [#allocation10], %s243
        %s245 = sand.u32 %s104, 1
        %s246 = smul.addr %s245, 256
        %s247 = scalar_lea.vmem [#allocation9], %s246
        // Predicated region
        $region37: #{tpu_custom_call.1} parent=31 // pred_check
          %p248 = pneg %p117
        $region38: #{tpu_custom_call.1} parent=31 // pred_check_branch
          %250 = sbr.rel (%p248) target = $region40
        $region39: #{tpu_custom_call.1} parent=31 // pred_region
          %251 = dma.done %s244, 4096
        $region40: #{tpu_custom_call.1} parent=31 // pred_fallthru
          _
        %p252 = pneg %p53
        %p253 = pneg %p50
        %s254 = sand.u32 %s78, 1
        %s255 = scalar_lea.sflag [#allocation7], %s254
        %s256 = sand.u32 %s78, 1
        %s257 = smul.addr %s256, 256
        %s258 = scalar_lea.vmem [#allocation6], %s257
        %p259 = pneg %p91
        %p260 = pneg %p88
        %s261 = sand.u32 %s104, 1
        %s262 = scalar_lea.sflag [#allocation10], %s261
        %s263 = sand.u32 %s104, 1
        %s264 = smul.addr %s263, 256
        %s265 = scalar_lea.vmem [#allocation9], %s264
        %p266 = pneg %p117
        %p267 = pneg %p114
        %p268 = pneg %p155
        %p269 = pneg %p152
        %s270 = sand.u32 %s142, 1
        %s271 = scalar_lea.sflag [#allocation8], %s270
        %s272 = sand.u32 %s142, 1
        %s273 = smul.addr %s272, 64
        %s274 = scalar_lea.vmem [#allocation11], %s273
        %s275 = ssub.s32 1, %s29
        %s276 = smul.u32 %s30, %s275
        %s277 = ssub.s32 0, %s30
        %s278 = smul.u32 %s277, %s29
        %s279 = sadd.s32 %s276, %s278
        %s280 = smul.u32 8, %s279
        %s281 = ssub.s32 1, %s29
        %s282 = smul.u32 %s30, %s281
        %s283 = ssub.s32 0, %s30
        %s284 = smul.u32 %s283, %s29
        %s285 = sadd.s32 %s282, %s284
        %s286 = smul.u32 8, %s285
        %p288 = scmp.eq.s32.totalorder %s30, 0
        // Predicated region
        $region41: #{tpu_custom_call.1} parent=31 // pred_check
          %p289 = pneg %p288
        $region42: #{tpu_custom_call.1} parent=31 // pred_check_branch
          %291 = sbr.rel (%p289) target = $region44
        $region43: #{tpu_custom_call.1} parent=31 // pred_region
          %292 = vst [vmem:[#allocation2] sm:$0xff] 0.0
          %293 = vst [vmem:[#allocation3] sm:$0xff] 0.0
        $region44: #{tpu_custom_call.1} parent=31 // pred_fallthru
          _
        %s294 = ssub.s32 1, %s29
        %s295 = smul.u32 %s30, %s294
        %s296 = ssub.s32 0, %s30
        %s297 = smul.u32 %s296, %s29
        %s298 = sadd.s32 %s295, %s297
        %s299 = smul.u32 %s298, 8
        %s300 = sld [smem:[#allocation5]]
        %p301 = scmp.ge.s32.totalorder %s299, %s300
        // Predicated region
        $region45: #{tpu_custom_call.1} parent=31 // pred_check
          %p302 = pneg %p301
        $region46: #{tpu_custom_call.1} parent=31 // pred_check_branch
          %304 = sbr.rel (%p302) target = $region48
        $region47: #{tpu_custom_call.1} parent=31 // pred_region
          %305 = vst [vmem:[%s274] sm:$0xff] 0.0
          %306 = vst [vmem:[%s274 + $0x8] sm:$0xff] 0.0
          %307 = vst [vmem:[%s274 + $0x10] sm:$0xff] 0.0
          %308 = vst [vmem:[%s274 + $0x18] sm:$0xff] 0.0
          %309 = vst [vmem:[%s274 + $0x20] sm:$0xff] 0.0
          %310 = vst [vmem:[%s274 + $0x28] sm:$0xff] 0.0
          %311 = vst [vmem:[%s274 + $0x30] sm:$0xff] 0.0
          %312 = vst [vmem:[%s274 + $0x38] sm:$0xff] 0.0
        $region48: #{tpu_custom_call.1} parent=31 // pred_fallthru
          _
        %p313 = scmp.lt.s32.totalorder %s299, %s300
        // Predicated region
        $region49: #{tpu_custom_call.1} parent=31 // pred_check
          %p314 = pneg %p313
        $region50: #{tpu_custom_call.1} parent=31 // pred_check_branch
          %316 = sbr.rel (%p314) target = $region52
        $region51: #{tpu_custom_call.1} parent=31 // pred_region
          %v317 = vld [vmem:[%s1] sm:$0xff]
          %v318 = vld [vmem:[%s247] sm:$0xff]
          %v319 = vld [vmem:[%s247 + $0x8] sm:$0xff]
          %v320 = vld [vmem:[%s247 + $0x10] sm:$0xff]
          %v321 = vld [vmem:[%s247 + $0x18] sm:$0xff]
          %v322 = vld [vmem:[%s247 + $0x20] sm:$0xff]
          %v323 = vld [vmem:[%s247 + $0x28] sm:$0xff]
          %v324 = vld [vmem:[%s247 + $0x30] sm:$0xff]
          %v325 = vld [vmem:[%s247 + $0x38] sm:$0xff]
          %v326 = vld [vmem:[%s247 + $0x40] sm:$0xff]
          %v327 = vld [vmem:[%s247 + $0x48] sm:$0xff]
          %v328 = vld [vmem:[%s247 + $0x50] sm:$0xff]
          %v329 = vld [vmem:[%s247 + $0x58] sm:$0xff]
          %v330 = vld [vmem:[%s247 + $0x60] sm:$0xff]
          %v331 = vld [vmem:[%s247 + $0x68] sm:$0xff]
          %v332 = vld [vmem:[%s247 + $0x70] sm:$0xff]
          %v333 = vld [vmem:[%s247 + $0x78] sm:$0xff]
          %v334 = vld [vmem:[%s247 + $0x80] sm:$0xff]
          %v335 = vld [vmem:[%s247 + $0x88] sm:$0xff]
          %v336 = vld [vmem:[%s247 + $0x90] sm:$0xff]
          %v337 = vld [vmem:[%s247 + $0x98] sm:$0xff]
          %v338 = vld [vmem:[%s247 + $0xa0] sm:$0xff]
          %v339 = vld [vmem:[%s247 + $0xa8] sm:$0xff]
          %v340 = vld [vmem:[%s247 + $0xb0] sm:$0xff]
          %v341 = vld [vmem:[%s247 + $0xb8] sm:$0xff]
          %v342 = vld [vmem:[%s247 + $0xc0] sm:$0xff]
          %v343 = vld [vmem:[%s247 + $0xc8] sm:$0xff]
          %v344 = vld [vmem:[%s247 + $0xd0] sm:$0xff]
          %v345 = vld [vmem:[%s247 + $0xd8] sm:$0xff]
          %v346 = vld [vmem:[%s247 + $0xe0] sm:$0xff]
          %v347 = vld [vmem:[%s247 + $0xe8] sm:$0xff]
          %v348 = vld [vmem:[%s247 + $0xf0] sm:$0xff]
          %v349 = vld [vmem:[%s247 + $0xf8] sm:$0xff]
          %s350 = smul.u32 %s29, 7
          %s351 = sadd.s32 %s299, %s350
          %v352 = vld [vmem:[#allocation2] sm:$0xff]
          %v353 = vld [vmem:[#allocation3] sm:$0xff]
          %s354 = smul.u32 %s350, 4
          %s355 = smul.addr %s354, 8
          %s356 = scalar_lea.vmem %s238, %s355 [#allocation6]
          %v357 = vld [vmem:[%s356] sm:$0xff]
          %v358 = vld [vmem:[%s356 + $0x8] sm:$0xff]
          %v359 = vld [vmem:[%s356 + $0x10] sm:$0xff]
          %v360 = vld [vmem:[%s356 + $0x18] sm:$0xff]
          %v361 = vpack.c.bf16 %v352, %v352
          %v394 = vunpack.c.l.b16 %v318
          %v395 = vunpack.c.h.b16 %v318
          %v396 = vunpack.c.l.b16 %v319
          %v397 = vunpack.c.h.b16 %v319
          %v398 = vunpack.c.l.b16 %v320
          %v399 = vunpack.c.h.b16 %v320
          %v400 = vunpack.c.l.b16 %v321
          %v401 = vunpack.c.h.b16 %v321
          %v402 = vunpack.c.l.b16 %v322
          %v403 = vunpack.c.h.b16 %v322
          %v404 = vunpack.c.l.b16 %v323
          %v405 = vunpack.c.h.b16 %v323
          %v406 = vunpack.c.l.b16 %v324
          %v407 = vunpack.c.h.b16 %v324
          %v408 = vunpack.c.l.b16 %v325
          %v409 = vunpack.c.h.b16 %v325
          %v410 = vunpack.c.l.b16 %v326
          %v411 = vunpack.c.h.b16 %v326
          %v412 = vunpack.c.l.b16 %v327
          %v413 = vunpack.c.h.b16 %v327
          %v414 = vunpack.c.l.b16 %v328
          %v415 = vunpack.c.h.b16 %v328
          %v416 = vunpack.c.l.b16 %v329
          %v417 = vunpack.c.h.b16 %v329
          %v418 = vunpack.c.l.b16 %v330
          %v419 = vunpack.c.h.b16 %v330
          %v420 = vunpack.c.l.b16 %v331
          %v421 = vunpack.c.h.b16 %v331
          %v422 = vunpack.c.l.b16 %v332
          %v423 = vunpack.c.h.b16 %v332
          %v424 = vunpack.c.l.b16 %v333
          %v425 = vunpack.c.h.b16 %v333
          %v426 = vunpack.c.l.b16 %v334
          %v427 = vunpack.c.h.b16 %v334
          %v428 = vunpack.c.l.b16 %v335
          %v429 = vunpack.c.h.b16 %v335
          %v430 = vunpack.c.l.b16 %v336
          %v431 = vunpack.c.h.b16 %v336
          %v432 = vunpack.c.l.b16 %v337
          %v433 = vunpack.c.h.b16 %v337
          %v434 = vunpack.c.l.b16 %v338
          %v435 = vunpack.c.h.b16 %v338
          %v436 = vunpack.c.l.b16 %v339
          %v437 = vunpack.c.h.b16 %v339
          %v438 = vunpack.c.l.b16 %v340
          %v439 = vunpack.c.h.b16 %v340
          %v440 = vunpack.c.l.b16 %v341
          %v441 = vunpack.c.h.b16 %v341
          %v442 = vunpack.c.l.b16 %v342
          %v443 = vunpack.c.h.b16 %v342
          %v444 = vunpack.c.l.b16 %v343
          %v445 = vunpack.c.h.b16 %v343
          %v446 = vunpack.c.l.b16 %v344
          %v447 = vunpack.c.h.b16 %v344
          %v448 = vunpack.c.l.b16 %v345
          %v449 = vunpack.c.h.b16 %v345
          %v450 = vunpack.c.l.b16 %v346
          %v451 = vunpack.c.h.b16 %v346
          %v452 = vunpack.c.l.b16 %v347
          %v453 = vunpack.c.h.b16 %v347
          %v454 = vunpack.c.l.b16 %v348
          %v455 = vunpack.c.h.b16 %v348
          %v456 = vunpack.c.l.b16 %v349
          %v457 = vunpack.c.h.b16 %v349
          %v458 = vpack.c.b16 %v398, %v394
          %v459 = vpack.c.b16 %v399, %v395
          %v460 = vpack.c.b16 %v400, %v396
          %v461 = vpack.c.b16 %v401, %v397
          %v462 = vpack.c.b16 %v406, %v402
          %v463 = vpack.c.b16 %v407, %v403
          %v464 = vpack.c.b16 %v408, %v404
          %v465 = vpack.c.b16 %v409, %v405
          %v466 = vpack.c.b16 %v414, %v410
          %v467 = vpack.c.b16 %v415, %v411
          %v468 = vpack.c.b16 %v416, %v412
          %v469 = vpack.c.b16 %v417, %v413
          %v470 = vpack.c.b16 %v422, %v418
          %v471 = vpack.c.b16 %v423, %v419
          %v472 = vpack.c.b16 %v424, %v420
          %v473 = vpack.c.b16 %v425, %v421
          %v474 = vpack.c.b16 %v430, %v426
          %v475 = vpack.c.b16 %v431, %v427
          %v476 = vpack.c.b16 %v432, %v428
          %v477 = vpack.c.b16 %v433, %v429
          %v478 = vpack.c.b16 %v438, %v434
          %v479 = vpack.c.b16 %v439, %v435
          %v480 = vpack.c.b16 %v440, %v436
          %v481 = vpack.c.b16 %v441, %v437
          %v482 = vpack.c.b16 %v446, %v442
          %v483 = vpack.c.b16 %v447, %v443
          %v484 = vpack.c.b16 %v448, %v444
          %v485 = vpack.c.b16 %v449, %v445
          %v486 = vpack.c.b16 %v454, %v450
          %v487 = vpack.c.b16 %v455, %v451
          %v488 = vpack.c.b16 %v456, %v452
          %v489 = vpack.c.b16 %v457, %v453
          %522 = vmatprep.subr.bf16.mxu0 %v459
          %523 = vmatpush1.bf16.msra.mxu0 %v458
          %524 = vmatprep.subr.bf16.mxu0 %v463
          %525 = vmatpush1.bf16.msra.mxu0 %v462
          %526 = vmatprep.subr.bf16.mxu0 %v467
          %527 = vmatpush1.bf16.msra.mxu0 %v466
          %528 = vmatprep.subr.bf16.mxu0 %v471
          %529 = vmatpush1.bf16.msra.mxu0 %v470
          %530 = vmatprep.subr.bf16.mxu0 %v475
          %531 = vmatpush1.bf16.msra.mxu0 %v474
          %532 = vmatprep.subr.bf16.mxu0 %v479
          %533 = vmatpush1.bf16.msra.mxu0 %v478
          %534 = vmatprep.subr.bf16.mxu0 %v483
          %535 = vmatpush1.bf16.msra.mxu0 %v482
          %536 = vmatprep.subr.bf16.mxu0 %v487
          %537 = vmatpush1.bf16.msra.mxu0 %v486
          %538 = vmatprep.subr.bf16.mxu0 0
          %539 = vmatpush1.bf16.msra.mxu0 0
          %540 = vmatprep.subr.bf16.mxu0 0
          %541 = vmatpush1.bf16.msra.mxu0 0
          %542 = vmatprep.subr.bf16.mxu0 0
          %543 = vmatpush1.bf16.msra.mxu0 0
          %544 = vmatprep.subr.bf16.mxu0 0
          %545 = vmatpush1.bf16.msra.mxu0 0
          %546 = vmatprep.subr.bf16.mxu0 0
          %547 = vmatpush1.bf16.msra.mxu0 0
          %548 = vmatprep.subr.bf16.mxu0 0
          %549 = vmatpush1.bf16.msra.mxu0 0
          %550 = vmatprep.subr.bf16.mxu0 0
          %551 = vmatpush1.bf16.msra.mxu0 0
          %552 = vmatprep.subr.bf16.mxu0 0
          %553 = vmatpush1.bf16.msra.mxu0 0
          %554 = vmatprep.mubr.bf16.mxu0 0
          %555 = vmatmul.mubr.bf16.gmra.mrb[0].mxu0 %v361
          %v556 = vpop.f32.mrb[0].mxu0
          %v557 = vadd.f32 0.0, %v556
          %v558 = vpop.f32.mrb[0].mxu0
          %v559 = vadd.f32 0.0, %v558
          %v560 = vpop.f32.mrb[0].mxu0
          %v561 = vpop.f32.mrb[0].mxu0
          %562 = vdwg.mxu0
          %563 = vmatprep.subr.bf16.mxu0 %v461
          %564 = vmatpush1.bf16.msra.mxu0 %v460
          %565 = vmatprep.subr.bf16.mxu0 %v465
          %566 = vmatpush1.bf16.msra.mxu0 %v464
          %567 = vmatprep.subr.bf16.mxu0 %v469
          %568 = vmatpush1.bf16.msra.mxu0 %v468
          %569 = vmatprep.subr.bf16.mxu0 %v473
          %570 = vmatpush1.bf16.msra.mxu0 %v472
          %571 = vmatprep.subr.bf16.mxu0 %v477
          %572 = vmatpush1.bf16.msra.mxu0 %v476
          %573 = vmatprep.subr.bf16.mxu0 %v481
          %574 = vmatpush1.bf16.msra.mxu0 %v480
          %575 = vmatprep.subr.bf16.mxu0 %v485
          %576 = vmatpush1.bf16.msra.mxu0 %v484
          %577 = vmatprep.subr.bf16.mxu0 %v489
          %578 = vmatpush1.bf16.msra.mxu0 %v488
          %579 = vmatprep.subr.bf16.mxu0 0
          %580 = vmatpush1.bf16.msra.mxu0 0
          %581 = vmatprep.subr.bf16.mxu0 0
          %582 = vmatpush1.bf16.msra.mxu0 0
          %583 = vmatprep.subr.bf16.mxu0 0
          %584 = vmatpush1.bf16.msra.mxu0 0
          %585 = vmatprep.subr.bf16.mxu0 0
          %586 = vmatpush1.bf16.msra.mxu0 0
          %587 = vmatprep.subr.bf16.mxu0 0
          %588 = vmatpush1.bf16.msra.mxu0 0
          %589 = vmatprep.subr.bf16.mxu0 0
          %590 = vmatpush1.bf16.msra.mxu0 0
          %591 = vmatprep.subr.bf16.mxu0 0
          %592 = vmatpush1.bf16.msra.mxu0 0
          %593 = vmatprep.subr.bf16.mxu0 0
          %594 = vmatpush1.bf16.msra.mxu0 0
          %595 = vmatprep.mubr.bf16.mxu0 0
          %596 = vmatmul.mubr.bf16.gmra.mrb[0].mxu0 %v361
          %v597 = vpop.f32.mrb[0].mxu0
          %v598 = vadd.f32 0.0, %v597
          %v599 = vpop.f32.mrb[0].mxu0
          %v600 = vadd.f32 0.0, %v599
          %v601 = vpop.f32.mrb[0].mxu0
          %v602 = vpop.f32.mrb[0].mxu0
          %603 = vdwg.mxu0
          %v604 = vadd.f32 %v357, %v557
          %v605 = vadd.f32 %v358, %v559
          %v606 = vadd.f32 %v359, %v598
          %v607 = vadd.f32 %v360, %v600
          %v608 = vxor.u32 %v604, 2147483648
          %v609 = vmul.f32 %v608, 1.442695
          %v610 = vpow.pop %v609
          %v611 = vadd.f32 %v610, 1.0
          %v612 = vrcp.pop %v611
          %v613 = vmul.f32 1.0, %v612
          %v614 = vxor.u32 %v605, 2147483648
          %v615 = vmul.f32 %v614, 1.442695
          %v616 = vpow.pop %v615
          %v617 = vadd.f32 %v616, 1.0
          %v618 = vrcp.pop %v617
          %v619 = vmul.f32 1.0, %v618
          %v620 = vtanh.pop %v606
          %v621 = vxor.u32 %v607, 2147483648
          %v622 = vmul.f32 %v621, 1.442695
          %v623 = vpow.pop %v622
          %v624 = vadd.f32 %v623, 1.0
          %v625 = vrcp.pop %v624
          %v626 = vmul.f32 1.0, %v625
          %v627 = vmul.f32 %v619, %v353
          %v628 = vmul.f32 %v613, %v620
          %v629 = vadd.f32 %v627, %v628
          %v630 = vtanh.pop %v629
          %v631 = vmul.f32 %v626, %v630
          %v632 = vstv %s351
          %vm633 = vcmp.lt.s32.totalorder %v632, %v317
          %v634 = vsel %vm633, 1, 0
          %635 = vset.pattern.permute.xlu0 0
          %636 = vperm.xlu0 %635, %v634
          %v637 = vpop.permute.xlu0 %636
          %vm638 = vcmp.eq.s32.totalorder %v637, 1
          %v639 = vsel %vm638, %v631, %v352
          %640 = vst [vmem:[#allocation2] sm:$0xff] %v639
          %v641 = vsel %vm638, %v629, %v353
          %642 = vst [vmem:[#allocation3] sm:$0xff] %v641
          %v643 = vsel %vm638, %v631, 0.0
          %s644 = smul.u32 %s350, 8
          %s645 = scalar_lea.vmem %s274, %s644 [#allocation11]
          %646 = vst [vmem:[%s645] sm:$0xff] %v643
          %s647 = smul.u32 %s29, 6
          %s648 = sadd.s32 %s294, %s647
          %s649 = sadd.s32 %s299, %s648
          %v650 = vld [vmem:[#allocation2] sm:$0xff]
          %v651 = vld [vmem:[#allocation3] sm:$0xff]
          %s652 = smul.u32 %s648, 4
          %s653 = smul.addr %s652, 8
          %s654 = scalar_lea.vmem %s238, %s653 [#allocation6]
          %v655 = vld [vmem:[%s654] sm:$0xff]
          %v656 = vld [vmem:[%s654 + $0x8] sm:$0xff]
          %v657 = vld [vmem:[%s654 + $0x10] sm:$0xff]
          %v658 = vld [vmem:[%s654 + $0x18] sm:$0xff]
          %v659 = vpack.c.bf16 %v650, %v650
          %660 = vmatprep.subr.bf16.mxu0 %v459
          %661 = vmatpush1.bf16.msra.mxu0 %v458
          %662 = vmatprep.subr.bf16.mxu0 %v463
          %663 = vmatpush1.bf16.msra.mxu0 %v462
          %664 = vmatprep.subr.bf16.mxu0 %v467
          %665 = vmatpush1.bf16.msra.mxu0 %v466
          %666 = vmatprep.subr.bf16.mxu0 %v471
          %667 = vmatpush1.bf16.msra.mxu0 %v470
          %668 = vmatprep.subr.bf16.mxu0 %v475
          %669 = vmatpush1.bf16.msra.mxu0 %v474
          %670 = vmatprep.subr.bf16.mxu0 %v479
          %671 = vmatpush1.bf16.msra.mxu0 %v478
          %672 = vmatprep.subr.bf16.mxu0 %v483
          %673 = vmatpush1.bf16.msra.mxu0 %v482
          %674 = vmatprep.subr.bf16.mxu0 %v487
          %675 = vmatpush1.bf16.msra.mxu0 %v486
          %676 = vmatprep.subr.bf16.mxu0 0
          %677 = vmatpush1.bf16.msra.mxu0 0
          %678 = vmatprep.subr.bf16.mxu0 0
          %679 = vmatpush1.bf16.msra.mxu0 0
          %680 = vmatprep.subr.bf16.mxu0 0
          %681 = vmatpush1.bf16.msra.mxu0 0
          %682 = vmatprep.subr.bf16.mxu0 0
          %683 = vmatpush1.bf16.msra.mxu0 0
          %684 = vmatprep.subr.bf16.mxu0 0
          %685 = vmatpush1.bf16.msra.mxu0 0
          %686 = vmatprep.subr.bf16.mxu0 0
          %687 = vmatpush1.bf16.msra.mxu0 0
          %688 = vmatprep.subr.bf16.mxu0 0
          %689 = vmatpush1.bf16.msra.mxu0 0
          %690 = vmatprep.subr.bf16.mxu0 0
          %691 = vmatpush1.bf16.msra.mxu0 0
          %692 = vmatprep.mubr.bf16.mxu0 0
          %693 = vmatmul.mubr.bf16.gmra.mrb[0].mxu0 %v659
          %v694 = vpop.f32.mrb[0].mxu0
          %v695 = vadd.f32 0.0, %v694
          %v696 = vpop.f32.mrb[0].mxu0
          %v697 = vadd.f32 0.0, %v696
          %v698 = vpop.f32.mrb[0].mxu0
          %v699 = vpop.f32.mrb[0].mxu0
          %700 = vdwg.mxu0
          %701 = vmatprep.subr.bf16.mxu0 %v461
          %702 = vmatpush1.bf16.msra.mxu0 %v460
          %703 = vmatprep.subr.bf16.mxu0 %v465
          %704 = vmatpush1.bf16.msra.mxu0 %v464
          %705 = vmatprep.subr.bf16.mxu0 %v469
          %706 = vmatpush1.bf16.msra.mxu0 %v468
          %707 = vmatprep.subr.bf16.mxu0 %v473
          %708 = vmatpush1.bf16.msra.mxu0 %v472
          %709 = vmatprep.subr.bf16.mxu0 %v477
          %710 = vmatpush1.bf16.msra.mxu0 %v476
          %711 = vmatprep.subr.bf16.mxu0 %v481
          %712 = vmatpush1.bf16.msra.mxu0 %v480
          %713 = vmatprep.subr.bf16.mxu0 %v485
          %714 = vmatpush1.bf16.msra.mxu0 %v484
          %715 = vmatprep.subr.bf16.mxu0 %v489
          %716 = vmatpush1.bf16.msra.mxu0 %v488
          %717 = vmatprep.subr.bf16.mxu0 0
          %718 = vmatpush1.bf16.msra.mxu0 0
          %719 = vmatprep.subr.bf16.mxu0 0
          %720 = vmatpush1.bf16.msra.mxu0 0
          %721 = vmatprep.subr.bf16.mxu0 0
          %722 = vmatpush1.bf16.msra.mxu0 0
          %723 = vmatprep.subr.bf16.mxu0 0
          %724 = vmatpush1.bf16.msra.mxu0 0
          %725 = vmatprep.subr.bf16.mxu0 0
          %726 = vmatpush1.bf16.msra.mxu0 0
          %727 = vmatprep.subr.bf16.mxu0 0
          %728 = vmatpush1.bf16.msra.mxu0 0
          %729 = vmatprep.subr.bf16.mxu0 0
          %730 = vmatpush1.bf16.msra.mxu0 0
          %731 = vmatprep.subr.bf16.mxu0 0
          %732 = vmatpush1.bf16.msra.mxu0 0
          %733 = vmatprep.mubr.bf16.mxu0 0
          %734 = vmatmul.mubr.bf16.gmra.mrb[0].mxu0 %v659
          %v735 = vpop.f32.mrb[0].mxu0
          %v736 = vadd.f32 0.0, %v735
          %v737 = vpop.f32.mrb[0].mxu0
          %v738 = vadd.f32 0.0, %v737
          %v739 = vpop.f32.mrb[0].mxu0
          %v740 = vpop.f32.mrb[0].mxu0
          %741 = vdwg.mxu0
          %v742 = vadd.f32 %v655, %v695
          %v743 = vadd.f32 %v656, %v697
          %v744 = vadd.f32 %v657, %v736
          %v745 = vadd.f32 %v658, %v738
          %v746 = vxor.u32 %v742, 2147483648
          %v747 = vmul.f32 %v746, 1.442695
          %v748 = vpow.pop %v747
          %v749 = vadd.f32 %v748, 1.0
          %v750 = vrcp.pop %v749
          %v751 = vmul.f32 1.0, %v750
          %v752 = vxor.u32 %v743, 2147483648
          %v753 = vmul.f32 %v752, 1.442695
          %v754 = vpow.pop %v753
          %v755 = vadd.f32 %v754, 1.0
          %v756 = vrcp.pop %v755
          %v757 = vmul.f32 1.0, %v756
          %v758 = vtanh.pop %v744
          %v759 = vxor.u32 %v745, 2147483648
          %v760 = vmul.f32 %v759, 1.442695
          %v761 = vpow.pop %v760
          %v762 = vadd.f32 %v761, 1.0
          %v763 = vrcp.pop %v762
          %v764 = vmul.f32 1.0, %v763
          %v765 = vmul.f32 %v757, %v651
          %v766 = vmul.f32 %v751, %v758
          %v767 = vadd.f32 %v765, %v766
          %v768 = vtanh.pop %v767
          %v769 = vmul.f32 %v764, %v768
          %v770 = vstv %s649
          %vm771 = vcmp.lt.s32.totalorder %v770, %v317
          %v772 = vsel %vm771, 1, 0
          %773 = vset.pattern.permute.xlu0 0
          %774 = vperm.xlu0 %773, %v772
          %v775 = vpop.permute.xlu0 %774
          %vm776 = vcmp.eq.s32.totalorder %v775, 1
          %v777 = vsel %vm776, %v769, %v650
          %778 = vst [vmem:[#allocation2] sm:$0xff] %v777
          %v779 = vsel %vm776, %v767, %v651
          %780 = vst [vmem:[#allocation3] sm:$0xff] %v779
          %v781 = vsel %vm776, %v769, 0.0
          %s782 = smul.u32 %s648, 8
          %s783 = scalar_lea.vmem %s274, %s782 [#allocation11]
          %784 = vst [vmem:[%s783] sm:$0xff] %v781
          %s785 = smul.u32 %s294, 2
          %s786 = smul.u32 %s29, 5
          %s787 = sadd.s32 %s785, %s786
          %s788 = sadd.s32 %s299, %s787
          %v789 = vld [vmem:[#allocation2] sm:$0xff]
          %v790 = vld [vmem:[#allocation3] sm:$0xff]
          %s791 = smul.u32 %s787, 4
          %s792 = smul.addr %s791, 8
          %s793 = scalar_lea.vmem %s238, %s792 [#allocation6]
          %v794 = vld [vmem:[%s793] sm:$0xff]
          %v795 = vld [vmem:[%s793 + $0x8] sm:$0xff]
          %v796 = vld [vmem:[%s793 + $0x10] sm:$0xff]
          %v797 = vld [vmem:[%s793 + $0x18] sm:$0xff]
          %v798 = vpack.c.bf16 %v789, %v789
          %799 = vmatprep.subr.bf16.mxu0 %v459
          %800 = vmatpush1.bf16.msra.mxu0 %v458
          %801 = vmatprep.subr.bf16.mxu0 %v463
          %802 = vmatpush1.bf16.msra.mxu0 %v462
          %803 = vmatprep.subr.bf16.mxu0 %v467
          %804 = vmatpush1.bf16.msra.mxu0 %v466
          %805 = vmatprep.subr.bf16.mxu0 %v471
          %806 = vmatpush1.bf16.msra.mxu0 %v470
          %807 = vmatprep.subr.bf16.mxu0 %v475
          %808 = vmatpush1.bf16.msra.mxu0 %v474
          %809 = vmatprep.subr.bf16.mxu0 %v479
          %810 = vmatpush1.bf16.msra.mxu0 %v478
          %811 = vmatprep.subr.bf16.mxu0 %v483
          %812 = vmatpush1.bf16.msra.mxu0 %v482
          %813 = vmatprep.subr.bf16.mxu0 %v487
          %814 = vmatpush1.bf16.msra.mxu0 %v486
          %815 = vmatprep.subr.bf16.mxu0 0
          %816 = vmatpush1.bf16.msra.mxu0 0
          %817 = vmatprep.subr.bf16.mxu0 0
          %818 = vmatpush1.bf16.msra.mxu0 0
          %819 = vmatprep.subr.bf16.mxu0 0
          %820 = vmatpush1.bf16.msra.mxu0 0
          %821 = vmatprep.subr.bf16.mxu0 0
          %822 = vmatpush1.bf16.msra.mxu0 0
          %823 = vmatprep.subr.bf16.mxu0 0
          %824 = vmatpush1.bf16.msra.mxu0 0
          %825 = vmatprep.subr.bf16.mxu0 0
          %826 = vmatpush1.bf16.msra.mxu0 0
          %827 = vmatprep.subr.bf16.mxu0 0
          %828 = vmatpush1.bf16.msra.mxu0 0
          %829 = vmatprep.subr.bf16.mxu0 0
          %830 = vmatpush1.bf16.msra.mxu0 0
          %831 = vmatprep.mubr.bf16.mxu0 0
          %832 = vmatmul.mubr.bf16.gmra.mrb[0].mxu0 %v798
          %v833 = vpop.f32.mrb[0].mxu0
          %v834 = vadd.f32 0.0, %v833
          %v835 = vpop.f32.mrb[0].mxu0
          %v836 = vadd.f32 0.0, %v835
          %v837 = vpop.f32.mrb[0].mxu0
          %v838 = vpop.f32.mrb[0].mxu0
          %839 = vdwg.mxu0
          %840 = vmatprep.subr.bf16.mxu0 %v461
          %841 = vmatpush1.bf16.msra.mxu0 %v460
          %842 = vmatprep.subr.bf16.mxu0 %v465
          %843 = vmatpush1.bf16.msra.mxu0 %v464
          %844 = vmatprep.subr.bf16.mxu0 %v469
          %845 = vmatpush1.bf16.msra.mxu0 %v468
          %846 = vmatprep.subr.bf16.mxu0 %v473
          %847 = vmatpush1.bf16.msra.mxu0 %v472
          %848 = vmatprep.subr.bf16.mxu0 %v477
          %849 = vmatpush1.bf16.msra.mxu0 %v476
          %850 = vmatprep.subr.bf16.mxu0 %v481
          %851 = vmatpush1.bf16.msra.mxu0 %v480
          %852 = vmatprep.subr.bf16.mxu0 %v485
          %853 = vmatpush1.bf16.msra.mxu0 %v484
          %854 = vmatprep.subr.bf16.mxu0 %v489
          %855 = vmatpush1.bf16.msra.mxu0 %v488
          %856 = vmatprep.subr.bf16.mxu0 0
          %857 = vmatpush1.bf16.msra.mxu0 0
          %858 = vmatprep.subr.bf16.mxu0 0
          %859 = vmatpush1.bf16.msra.mxu0 0
          %860 = vmatprep.subr.bf16.mxu0 0
          %861 = vmatpush1.bf16.msra.mxu0 0
          %862 = vmatprep.subr.bf16.mxu0 0
          %863 = vmatpush1.bf16.msra.mxu0 0
          %864 = vmatprep.subr.bf16.mxu0 0
          %865 = vmatpush1.bf16.msra.mxu0 0
          %866 = vmatprep.subr.bf16.mxu0 0
          %867 = vmatpush1.bf16.msra.mxu0 0
          %868 = vmatprep.subr.bf16.mxu0 0
          %869 = vmatpush1.bf16.msra.mxu0 0
          %870 = vmatprep.subr.bf16.mxu0 0
          %871 = vmatpush1.bf16.msra.mxu0 0
          %872 = vmatprep.mubr.bf16.mxu0 0
          %873 = vmatmul.mubr.bf16.gmra.mrb[0].mxu0 %v798
          %v874 = vpop.f32.mrb[0].mxu0
          %v875 = vadd.f32 0.0, %v874
          %v876 = vpop.f32.mrb[0].mxu0
          %v877 = vadd.f32 0.0, %v876
          %v878 = vpop.f32.mrb[0].mxu0
          %v879 = vpop.f32.mrb[0].mxu0
          %880 = vdwg.mxu0
          %v881 = vadd.f32 %v794, %v834
          %v882 = vadd.f32 %v795, %v836
          %v883 = vadd.f32 %v796, %v875
          %v884 = vadd.f32 %v797, %v877
          %v885 = vxor.u32 %v881, 2147483648
          %v886 = vmul.f32 %v885, 1.442695
          %v887 = vpow.pop %v886
          %v888 = vadd.f32 %v887, 1.0
          %v889 = vrcp.pop %v888
          %v890 = vmul.f32 1.0, %v889
          %v891 = vxor.u32 %v882, 2147483648
          %v892 = vmul.f32 %v891, 1.442695
          %v893 = vpow.pop %v892
          %v894 = vadd.f32 %v893, 1.0
          %v895 = vrcp.pop %v894
          %v896 = vmul.f32 1.0, %v895
          %v897 = vtanh.pop %v883
          %v898 = vxor.u32 %v884, 2147483648
          %v899 = vmul.f32 %v898, 1.442695
          %v900 = vpow.pop %v899
          %v901 = vadd.f32 %v900, 1.0
          %v902 = vrcp.pop %v901
          %v903 = vmul.f32 1.0, %v902
          %v904 = vmul.f32 %v896, %v790
          %v905 = vmul.f32 %v890, %v897
          %v906 = vadd.f32 %v904, %v905
          %v907 = vtanh.pop %v906
          %v908 = vmul.f32 %v903, %v907
          %v909 = vstv %s788
          %vm910 = vcmp.lt.s32.totalorder %v909, %v317
          %v911 = vsel %vm910, 1, 0
          %912 = vset.pattern.permute.xlu0 0
          %913 = vperm.xlu0 %912, %v911
          %v914 = vpop.permute.xlu0 %913
          %vm915 = vcmp.eq.s32.totalorder %v914, 1
          %v916 = vsel %vm915, %v908, %v789
          %917 = vst [vmem:[#allocation2] sm:$0xff] %v916
          %v918 = vsel %vm915, %v906, %v790
          %919 = vst [vmem:[#allocation3] sm:$0xff] %v918
          %v920 = vsel %vm915, %v908, 0.0
          %s921 = smul.u32 %s787, 8
          %s922 = scalar_lea.vmem %s274, %s921 [#allocation11]
          %923 = vst [vmem:[%s922] sm:$0xff] %v920
          %s924 = smul.u32 %s294, 3
          %s925 = smul.u32 %s29, 4
          %s926 = sadd.s32 %s924, %s925
          %s927 = sadd.s32 %s299, %s926
          %v928 = vld [vmem:[#allocation2] sm:$0xff]
          %v929 = vld [vmem:[#allocation3] sm:$0xff]
          %s930 = smul.u32 %s926, 4
          %s931 = smul.addr %s930, 8
          %s932 = scalar_lea.vmem %s238, %s931 [#allocation6]
          %v933 = vld [vmem:[%s932] sm:$0xff]
          %v934 = vld [vmem:[%s932 + $0x8] sm:$0xff]
          %v935 = vld [vmem:[%s932 + $0x10] sm:$0xff]
          %v936 = vld [vmem:[%s932 + $0x18] sm:$0xff]
          %v937 = vpack.c.bf16 %v928, %v928
          %938 = vmatprep.subr.bf16.mxu0 %v459
          %939 = vmatpush1.bf16.msra.mxu0 %v458
          %940 = vmatprep.subr.bf16.mxu0 %v463
          %941 = vmatpush1.bf16.msra.mxu0 %v462
          %942 = vmatprep.subr.bf16.mxu0 %v467
          %943 = vmatpush1.bf16.msra.mxu0 %v466
          %944 = vmatprep.subr.bf16.mxu0 %v471
          %945 = vmatpush1.bf16.msra.mxu0 %v470
          %946 = vmatprep.subr.bf16.mxu0 %v475
          %947 = vmatpush1.bf16.msra.mxu0 %v474
          %948 = vmatprep.subr.bf16.mxu0 %v479
          %949 = vmatpush1.bf16.msra.mxu0 %v478
          %950 = vmatprep.subr.bf16.mxu0 %v483
          %951 = vmatpush1.bf16.msra.mxu0 %v482
          %952 = vmatprep.subr.bf16.mxu0 %v487
          %953 = vmatpush1.bf16.msra.mxu0 %v486
          %954 = vmatprep.subr.bf16.mxu0 0
          %955 = vmatpush1.bf16.msra.mxu0 0
          %956 = vmatprep.subr.bf16.mxu0 0
          %957 = vmatpush1.bf16.msra.mxu0 0
          %958 = vmatprep.subr.bf16.mxu0 0
          %959 = vmatpush1.bf16.msra.mxu0 0
          %960 = vmatprep.subr.bf16.mxu0 0
          %961 = vmatpush1.bf16.msra.mxu0 0
          %962 = vmatprep.subr.bf16.mxu0 0
          %963 = vmatpush1.bf16.msra.mxu0 0
          %964 = vmatprep.subr.bf16.mxu0 0
          %965 = vmatpush1.bf16.msra.mxu0 0
          %966 = vmatprep.subr.bf16.mxu0 0
          %967 = vmatpush1.bf16.msra.mxu0 0
          %968 = vmatprep.subr.bf16.mxu0 0
          %969 = vmatpush1.bf16.msra.mxu0 0
          %970 = vmatprep.mubr.bf16.mxu0 0
          %971 = vmatmul.mubr.bf16.gmra.mrb[0].mxu0 %v937
          %v972 = vpop.f32.mrb[0].mxu0
          %v973 = vadd.f32 0.0, %v972
          %v974 = vpop.f32.mrb[0].mxu0
          %v975 = vadd.f32 0.0, %v974
          %v976 = vpop.f32.mrb[0].mxu0
          %v977 = vpop.f32.mrb[0].mxu0
          %978 = vdwg.mxu0
          %979 = vmatprep.subr.bf16.mxu0 %v461
          %980 = vmatpush1.bf16.msra.mxu0 %v460
          %981 = vmatprep.subr.bf16.mxu0 %v465
          %982 = vmatpush1.bf16.msra.mxu0 %v464
          %983 = vmatprep.subr.bf16.mxu0 %v469
          %984 = vmatpush1.bf16.msra.mxu0 %v468
          %985 = vmatprep.subr.bf16.mxu0 %v473
          %986 = vmatpush1.bf16.msra.mxu0 %v472
          %987 = vmatprep.subr.bf16.mxu0 %v477
          %988 = vmatpush1.bf16.msra.mxu0 %v476
          %989 = vmatprep.subr.bf16.mxu0 %v481
          %990 = vmatpush1.bf16.msra.mxu0 %v480
          %991 = vmatprep.subr.bf16.mxu0 %v485
          %992 = vmatpush1.bf16.msra.mxu0 %v484
          %993 = vmatprep.subr.bf16.mxu0 %v489
          %994 = vmatpush1.bf16.msra.mxu0 %v488
          %995 = vmatprep.subr.bf16.mxu0 0
          %996 = vmatpush1.bf16.msra.mxu0 0
          %997 = vmatprep.subr.bf16.mxu0 0
          %998 = vmatpush1.bf16.msra.mxu0 0
          %999 = vmatprep.subr.bf16.mxu0 0
          %1000 = vmatpush1.bf16.msra.mxu0 0
          %1001 = vmatprep.subr.bf16.mxu0 0
          %1002 = vmatpush1.bf16.msra.mxu0 0
          %1003 = vmatprep.subr.bf16.mxu0 0
          %1004 = vmatpush1.bf16.msra.mxu0 0
          %1005 = vmatprep.subr.bf16.mxu0 0
          %1006 = vmatpush1.bf16.msra.mxu0 0
          %1007 = vmatprep.subr.bf16.mxu0 0
          %1008 = vmatpush1.bf16.msra.mxu0 0
          %1009 = vmatprep.subr.bf16.mxu0 0
          %1010 = vmatpush1.bf16.msra.mxu0 0
          %1011 = vmatprep.mubr.bf16.mxu0 0
          %1012 = vmatmul.mubr.bf16.gmra.mrb[0].mxu0 %v937
          %v1013 = vpop.f32.mrb[0].mxu0
          %v1014 = vadd.f32 0.0, %v1013
          %v1015 = vpop.f32.mrb[0].mxu0
          %v1016 = vadd.f32 0.0, %v1015
          %v1017 = vpop.f32.mrb[0].mxu0
          %v1018 = vpop.f32.mrb[0].mxu0
          %1019 = vdwg.mxu0
          %v1020 = vadd.f32 %v933, %v973
          %v1021 = vadd.f32 %v934, %v975
          %v1022 = vadd.f32 %v935, %v1014
          %v1023 = vadd.f32 %v936, %v1016
          %v1024 = vxor.u32 %v1020, 2147483648
          %v1025 = vmul.f32 %v1024, 1.442695
          %v1026 = vpow.pop %v1025
          %v1027 = vadd.f32 %v1026, 1.0
          %v1028 = vrcp.pop %v1027
          %v1029 = vmul.f32 1.0, %v1028
          %v1030 = vxor.u32 %v1021, 2147483648
          %v1031 = vmul.f32 %v1030, 1.442695
          %v1032 = vpow.pop %v1031
          %v1033 = vadd.f32 %v1032, 1.0
          %v1034 = vrcp.pop %v1033
          %v1035 = vmul.f32 1.0, %v1034
          %v1036 = vtanh.pop %v1022
          %v1037 = vxor.u32 %v1023, 2147483648
          %v1038 = vmul.f32 %v1037, 1.442695
          %v1039 = vpow.pop %v1038
          %v1040 = vadd.f32 %v1039, 1.0
          %v1041 = vrcp.pop %v1040
          %v1042 = vmul.f32 1.0, %v1041
          %v1043 = vmul.f32 %v1035, %v929
          %v1044 = vmul.f32 %v1029, %v1036
          %v1045 = vadd.f32 %v1043, %v1044
          %v1046 = vtanh.pop %v1045
          %v1047 = vmul.f32 %v1042, %v1046
          %v1048 = vstv %s927
          %vm1049 = vcmp.lt.s32.totalorder %v1048, %v317
          %v1050 = vsel %vm1049, 1, 0
          %1051 = vset.pattern.permute.xlu0 0
          %1052 = vperm.xlu0 %1051, %v1050
          %v1053 = vpop.permute.xlu0 %1052
          %vm1054 = vcmp.eq.s32.totalorder %v1053, 1
          %v1055 = vsel %vm1054, %v1047, %v928
          %1056 = vst [vmem:[#allocation2] sm:$0xff] %v1055
          %v1057 = vsel %vm1054, %v1045, %v929
          %1058 = vst [vmem:[#allocation3] sm:$0xff] %v1057
          %v1059 = vsel %vm1054, %v1047, 0.0
          %s1060 = smul.u32 %s926, 8
          %s1061 = scalar_lea.vmem %s274, %s1060 [#allocation11]
          %1062 = vst [vmem:[%s1061] sm:$0xff] %v1059
          %s1063 = smul.u32 %s294, 4
          %s1064 = smul.u32 %s29, 3
          %s1065 = sadd.s32 %s1063, %s1064
          %s1066 = sadd.s32 %s299, %s1065
          %v1067 = vld [vmem:[#allocation2] sm:$0xff]
          %v1068 = vld [vmem:[#allocation3] sm:$0xff]
          %s1069 = smul.u32 %s1065, 4
          %s1070 = smul.addr %s1069, 8
          %s1071 = scalar_lea.vmem %s238, %s1070 [#allocation6]
          %v1072 = vld [vmem:[%s1071] sm:$0xff]
          %v1073 = vld [vmem:[%s1071 + $0x8] sm:$0xff]
          %v1074 = vld [vmem:[%s1071 + $0x10] sm:$0xff]
          %v1075 = vld [vmem:[%s1071 + $0x18] sm:$0xff]
          %v1076 = vpack.c.bf16 %v1067, %v1067
          %1077 = vmatprep.subr.bf16.mxu0 %v459
          %1078 = vmatpush1.bf16.msra.mxu0 %v458
          %1079 = vmatprep.subr.bf16.mxu0 %v463
          %1080 = vmatpush1.bf16.msra.mxu0 %v462
          %1081 = vmatprep.subr.bf16.mxu0 %v467
          %1082 = vmatpush1.bf16.msra.mxu0 %v466
          %1083 = vmatprep.subr.bf16.mxu0 %v471
          %1084 = vmatpush1.bf16.msra.mxu0 %v470
          %1085 = vmatprep.subr.bf16.mxu0 %v475
          %1086 = vmatpush1.bf16.msra.mxu0 %v474
          %1087 = vmatprep.subr.bf16.mxu0 %v479
          %1088 = vmatpush1.bf16.msra.mxu0 %v478
          %1089 = vmatprep.subr.bf16.mxu0 %v483
          %1090 = vmatpush1.bf16.msra.mxu0 %v482
          %1091 = vmatprep.subr.bf16.mxu0 %v487
          %1092 = vmatpush1.bf16.msra.mxu0 %v486
          %1093 = vmatprep.subr.bf16.mxu0 0
          %1094 = vmatpush1.bf16.msra.mxu0 0
          %1095 = vmatprep.subr.bf16.mxu0 0
          %1096 = vmatpush1.bf16.msra.mxu0 0
          %1097 = vmatprep.subr.bf16.mxu0 0
          %1098 = vmatpush1.bf16.msra.mxu0 0
          %1099 = vmatprep.subr.bf16.mxu0 0
          %1100 = vmatpush1.bf16.msra.mxu0 0
          %1101 = vmatprep.subr.bf16.mxu0 0
          %1102 = vmatpush1.bf16.msra.mxu0 0
          %1103 = vmatprep.subr.bf16.mxu0 0
          %1104 = vmatpush1.bf16.msra.mxu0 0
          %1105 = vmatprep.subr.bf16.mxu0 0
          %1106 = vmatpush1.bf16.msra.mxu0 0
          %1107 = vmatprep.subr.bf16.mxu0 0
          %1108 = vmatpush1.bf16.msra.mxu0 0
          %1109 = vmatprep.mubr.bf16.mxu0 0
          %1110 = vmatmul.mubr.bf16.gmra.mrb[0].mxu0 %v1076
          %v1111 = vpop.f32.mrb[0].mxu0
          %v1112 = vadd.f32 0.0, %v1111
          %v1113 = vpop.f32.mrb[0].mxu0
          %v1114 = vadd.f32 0.0, %v1113
          %v1115 = vpop.f32.mrb[0].mxu0
          %v1116 = vpop.f32.mrb[0].mxu0
          %1117 = vdwg.mxu0
          %1118 = vmatprep.subr.bf16.mxu0 %v461
          %1119 = vmatpush1.bf16.msra.mxu0 %v460
          %1120 = vmatprep.subr.bf16.mxu0 %v465
          %1121 = vmatpush1.bf16.msra.mxu0 %v464
          %1122 = vmatprep.subr.bf16.mxu0 %v469
          %1123 = vmatpush1.bf16.msra.mxu0 %v468
          %1124 = vmatprep.subr.bf16.mxu0 %v473
          %1125 = vmatpush1.bf16.msra.mxu0 %v472
          %1126 = vmatprep.subr.bf16.mxu0 %v477
          %1127 = vmatpush1.bf16.msra.mxu0 %v476
          %1128 = vmatprep.subr.bf16.mxu0 %v481
          %1129 = vmatpush1.bf16.msra.mxu0 %v480
          %1130 = vmatprep.subr.bf16.mxu0 %v485
          %1131 = vmatpush1.bf16.msra.mxu0 %v484
          %1132 = vmatprep.subr.bf16.mxu0 %v489
          %1133 = vmatpush1.bf16.msra.mxu0 %v488
          %1134 = vmatprep.subr.bf16.mxu0 0
          %1135 = vmatpush1.bf16.msra.mxu0 0
          %1136 = vmatprep.subr.bf16.mxu0 0
          %1137 = vmatpush1.bf16.msra.mxu0 0
          %1138 = vmatprep.subr.bf16.mxu0 0
          %1139 = vmatpush1.bf16.msra.mxu0 0
          %1140 = vmatprep.subr.bf16.mxu0 0
          %1141 = vmatpush1.bf16.msra.mxu0 0
          %1142 = vmatprep.subr.bf16.mxu0 0
          %1143 = vmatpush1.bf16.msra.mxu0 0
          %1144 = vmatprep.subr.bf16.mxu0 0
          %1145 = vmatpush1.bf16.msra.mxu0 0
          %1146 = vmatprep.subr.bf16.mxu0 0
          %1147 = vmatpush1.bf16.msra.mxu0 0
          %1148 = vmatprep.subr.bf16.mxu0 0
          %1149 = vmatpush1.bf16.msra.mxu0 0
          %1150 = vmatprep.mubr.bf16.mxu0 0
          %1151 = vmatmul.mubr.bf16.gmra.mrb[0].mxu0 %v1076
          %v1152 = vpop.f32.mrb[0].mxu0
          %v1153 = vadd.f32 0.0, %v1152
          %v1154 = vpop.f32.mrb[0].mxu0
          %v1155 = vadd.f32 0.0, %v1154
          %v1156 = vpop.f32.mrb[0].mxu0
          %v1157 = vpop.f32.mrb[0].mxu0
          %1158 = vdwg.mxu0
          %v1159 = vadd.f32 %v1072, %v1112
          %v1160 = vadd.f32 %v1073, %v1114
          %v1161 = vadd.f32 %v1074, %v1153
          %v1162 = vadd.f32 %v1075, %v1155
          %v1163 = vxor.u32 %v1159, 2147483648
          %v1164 = vmul.f32 %v1163, 1.442695
          %v1165 = vpow.pop %v1164
          %v1166 = vadd.f32 %v1165, 1.0
          %v1167 = vrcp.pop %v1166
          %v1168 = vmul.f32 1.0, %v1167
          %v1169 = vxor.u32 %v1160, 2147483648
          %v1170 = vmul.f32 %v1169, 1.442695
          %v1171 = vpow.pop %v1170
          %v1172 = vadd.f32 %v1171, 1.0
          %v1173 = vrcp.pop %v1172
          %v1174 = vmul.f32 1.0, %v1173
          %v1175 = vtanh.pop %v1161
          %v1176 = vxor.u32 %v1162, 2147483648
          %v1177 = vmul.f32 %v1176, 1.442695
          %v1178 = vpow.pop %v1177
          %v1179 = vadd.f32 %v1178, 1.0
          %v1180 = vrcp.pop %v1179
          %v1181 = vmul.f32 1.0, %v1180
          %v1182 = vmul.f32 %v1174, %v1068
          %v1183 = vmul.f32 %v1168, %v1175
          %v1184 = vadd.f32 %v1182, %v1183
          %v1185 = vtanh.pop %v1184
          %v1186 = vmul.f32 %v1181, %v1185
          %v1187 = vstv %s1066
          %vm1188 = vcmp.lt.s32.totalorder %v1187, %v317
          %v1189 = vsel %vm1188, 1, 0
          %1190 = vset.pattern.permute.xlu0 0
          %1191 = vperm.xlu0 %1190, %v1189
          %v1192 = vpop.permute.xlu0 %1191
          %vm1193 = vcmp.eq.s32.totalorder %v1192, 1
          %v1194 = vsel %vm1193, %v1186, %v1067
          %1195 = vst [vmem:[#allocation2] sm:$0xff] %v1194
          %v1196 = vsel %vm1193, %v1184, %v1068
          %1197 = vst [vmem:[#allocation3] sm:$0xff] %v1196
          %v1198 = vsel %vm1193, %v1186, 0.0
          %s1199 = smul.u32 %s1065, 8
          %s1200 = scalar_lea.vmem %s274, %s1199 [#allocation11]
          %1201 = vst [vmem:[%s1200] sm:$0xff] %v1198
          %s1202 = smul.u32 %s294, 5
          %s1203 = smul.u32 %s29, 2
          %s1204 = sadd.s32 %s1202, %s1203
          %s1205 = sadd.s32 %s299, %s1204
          %v1206 = vld [vmem:[#allocation2] sm:$0xff]
          %v1207 = vld [vmem:[#allocation3] sm:$0xff]
          %s1208 = smul.u32 %s1204, 4
          %s1209 = smul.addr %s1208, 8
          %s1210 = scalar_lea.vmem %s238, %s1209 [#allocation6]
          %v1211 = vld [vmem:[%s1210] sm:$0xff]
          %v1212 = vld [vmem:[%s1210 + $0x8] sm:$0xff]
          %v1213 = vld [vmem:[%s1210 + $0x10] sm:$0xff]
          %v1214 = vld [vmem:[%s1210 + $0x18] sm:$0xff]
          %v1215 = vpack.c.bf16 %v1206, %v1206
          %1216 = vmatprep.subr.bf16.mxu0 %v459
          %1217 = vmatpush1.bf16.msra.mxu0 %v458
          %1218 = vmatprep.subr.bf16.mxu0 %v463
          %1219 = vmatpush1.bf16.msra.mxu0 %v462
          %1220 = vmatprep.subr.bf16.mxu0 %v467
          %1221 = vmatpush1.bf16.msra.mxu0 %v466
          %1222 = vmatprep.subr.bf16.mxu0 %v471
          %1223 = vmatpush1.bf16.msra.mxu0 %v470
          %1224 = vmatprep.subr.bf16.mxu0 %v475
          %1225 = vmatpush1.bf16.msra.mxu0 %v474
          %1226 = vmatprep.subr.bf16.mxu0 %v479
          %1227 = vmatpush1.bf16.msra.mxu0 %v478
          %1228 = vmatprep.subr.bf16.mxu0 %v483
          %1229 = vmatpush1.bf16.msra.mxu0 %v482
          %1230 = vmatprep.subr.bf16.mxu0 %v487
          %1231 = vmatpush1.bf16.msra.mxu0 %v486
          %1232 = vmatprep.subr.bf16.mxu0 0
          %1233 = vmatpush1.bf16.msra.mxu0 0
          %1234 = vmatprep.subr.bf16.mxu0 0
          %1235 = vmatpush1.bf16.msra.mxu0 0
          %1236 = vmatprep.subr.bf16.mxu0 0
          %1237 = vmatpush1.bf16.msra.mxu0 0
          %1238 = vmatprep.subr.bf16.mxu0 0
          %1239 = vmatpush1.bf16.msra.mxu0 0
          %1240 = vmatprep.subr.bf16.mxu0 0
          %1241 = vmatpush1.bf16.msra.mxu0 0
          %1242 = vmatprep.subr.bf16.mxu0 0
          %1243 = vmatpush1.bf16.msra.mxu0 0
          %1244 = vmatprep.subr.bf16.mxu0 0
          %1245 = vmatpush1.bf16.msra.mxu0 0
          %1246 = vmatprep.subr.bf16.mxu0 0
          %1247 = vmatpush1.bf16.msra.mxu0 0
          %1248 = vmatprep.mubr.bf16.mxu0 0
          %1249 = vmatmul.mubr.bf16.gmra.mrb[0].mxu0 %v1215
          %v1250 = vpop.f32.mrb[0].mxu0
          %v1251 = vadd.f32 0.0, %v1250
          %v1252 = vpop.f32.mrb[0].mxu0
          %v1253 = vadd.f32 0.0, %v1252
          %v1254 = vpop.f32.mrb[0].mxu0
          %v1255 = vpop.f32.mrb[0].mxu0
          %1256 = vdwg.mxu0
          %1257 = vmatprep.subr.bf16.mxu0 %v461
          %1258 = vmatpush1.bf16.msra.mxu0 %v460
          %1259 = vmatprep.subr.bf16.mxu0 %v465
          %1260 = vmatpush1.bf16.msra.mxu0 %v464
          %1261 = vmatprep.subr.bf16.mxu0 %v469
          %1262 = vmatpush1.bf16.msra.mxu0 %v468
          %1263 = vmatprep.subr.bf16.mxu0 %v473
          %1264 = vmatpush1.bf16.msra.mxu0 %v472
          %1265 = vmatprep.subr.bf16.mxu0 %v477
          %1266 = vmatpush1.bf16.msra.mxu0 %v476
          %1267 = vmatprep.subr.bf16.mxu0 %v481
          %1268 = vmatpush1.bf16.msra.mxu0 %v480
          %1269 = vmatprep.subr.bf16.mxu0 %v485
          %1270 = vmatpush1.bf16.msra.mxu0 %v484
          %1271 = vmatprep.subr.bf16.mxu0 %v489
          %1272 = vmatpush1.bf16.msra.mxu0 %v488
          %1273 = vmatprep.subr.bf16.mxu0 0
          %1274 = vmatpush1.bf16.msra.mxu0 0
          %1275 = vmatprep.subr.bf16.mxu0 0
          %1276 = vmatpush1.bf16.msra.mxu0 0
          %1277 = vmatprep.subr.bf16.mxu0 0
          %1278 = vmatpush1.bf16.msra.mxu0 0
          %1279 = vmatprep.subr.bf16.mxu0 0
          %1280 = vmatpush1.bf16.msra.mxu0 0
          %1281 = vmatprep.subr.bf16.mxu0 0
          %1282 = vmatpush1.bf16.msra.mxu0 0
          %1283 = vmatprep.subr.bf16.mxu0 0
          %1284 = vmatpush1.bf16.msra.mxu0 0
          %1285 = vmatprep.subr.bf16.mxu0 0
          %1286 = vmatpush1.bf16.msra.mxu0 0
          %1287 = vmatprep.subr.bf16.mxu0 0
          %1288 = vmatpush1.bf16.msra.mxu0 0
          %1289 = vmatprep.mubr.bf16.mxu0 0
          %1290 = vmatmul.mubr.bf16.gmra.mrb[0].mxu0 %v1215
          %v1291 = vpop.f32.mrb[0].mxu0
          %v1292 = vadd.f32 0.0, %v1291
          %v1293 = vpop.f32.mrb[0].mxu0
          %v1294 = vadd.f32 0.0, %v1293
          %v1295 = vpop.f32.mrb[0].mxu0
          %v1296 = vpop.f32.mrb[0].mxu0
          %1297 = vdwg.mxu0
          %v1298 = vadd.f32 %v1211, %v1251
          %v1299 = vadd.f32 %v1212, %v1253
          %v1300 = vadd.f32 %v1213, %v1292
          %v1301 = vadd.f32 %v1214, %v1294
          %v1302 = vxor.u32 %v1298, 2147483648
          %v1303 = vmul.f32 %v1302, 1.442695
          %v1304 = vpow.pop %v1303
          %v1305 = vadd.f32 %v1304, 1.0
          %v1306 = vrcp.pop %v1305
          %v1307 = vmul.f32 1.0, %v1306
          %v1308 = vxor.u32 %v1299, 2147483648
          %v1309 = vmul.f32 %v1308, 1.442695
          %v1310 = vpow.pop %v1309
          %v1311 = vadd.f32 %v1310, 1.0
          %v1312 = vrcp.pop %v1311
          %v1313 = vmul.f32 1.0, %v1312
          %v1314 = vtanh.pop %v1300
          %v1315 = vxor.u32 %v1301, 2147483648
          %v1316 = vmul.f32 %v1315, 1.442695
          %v1317 = vpow.pop %v1316
          %v1318 = vadd.f32 %v1317, 1.0
          %v1319 = vrcp.pop %v1318
          %v1320 = vmul.f32 1.0, %v1319
          %v1321 = vmul.f32 %v1313, %v1207
          %v1322 = vmul.f32 %v1307, %v1314
          %v1323 = vadd.f32 %v1321, %v1322
          %v1324 = vtanh.pop %v1323
          %v1325 = vmul.f32 %v1320, %v1324
          %v1326 = vstv %s1205
          %vm1327 = vcmp.lt.s32.totalorder %v1326, %v317
          %v1328 = vsel %vm1327, 1, 0
          %1329 = vset.pattern.permute.xlu0 0
          %1330 = vperm.xlu0 %1329, %v1328
          %v1331 = vpop.permute.xlu0 %1330
          %vm1332 = vcmp.eq.s32.totalorder %v1331, 1
          %v1333 = vsel %vm1332, %v1325, %v1206
          %1334 = vst [vmem:[#allocation2] sm:$0xff] %v1333
          %v1335 = vsel %vm1332, %v1323, %v1207
          %1336 = vst [vmem:[#allocation3] sm:$0xff] %v1335
          %v1337 = vsel %vm1332, %v1325, 0.0
          %s1338 = smul.u32 %s1204, 8
          %s1339 = scalar_lea.vmem %s274, %s1338 [#allocation11]
          %1340 = vst [vmem:[%s1339] sm:$0xff] %v1337
          %s1341 = smul.u32 %s294, 6
          %s1342 = sadd.s32 %s1341, %s29
          %s1343 = sadd.s32 %s299, %s1342
          %v1344 = vld [vmem:[#allocation2] sm:$0xff]
          %v1345 = vld [vmem:[#allocation3] sm:$0xff]
          %s1346 = smul.u32 %s1342, 4
          %s1347 = smul.addr %s1346, 8
          %s1348 = scalar_lea.vmem %s238, %s1347 [#allocation6]
          %v1349 = vld [vmem:[%s1348] sm:$0xff]
          %v1350 = vld [vmem:[%s1348 + $0x8] sm:$0xff]
          %v1351 = vld [vmem:[%s1348 + $0x10] sm:$0xff]
          %v1352 = vld [vmem:[%s1348 + $0x18] sm:$0xff]
          %v1353 = vpack.c.bf16 %v1344, %v1344
          %1354 = vmatprep.subr.bf16.mxu0 %v459
          %1355 = vmatpush1.bf16.msra.mxu0 %v458
          %1356 = vmatprep.subr.bf16.mxu0 %v463
          %1357 = vmatpush1.bf16.msra.mxu0 %v462
          %1358 = vmatprep.subr.bf16.mxu0 %v467
          %1359 = vmatpush1.bf16.msra.mxu0 %v466
          %1360 = vmatprep.subr.bf16.mxu0 %v471
          %1361 = vmatpush1.bf16.msra.mxu0 %v470
          %1362 = vmatprep.subr.bf16.mxu0 %v475
          %1363 = vmatpush1.bf16.msra.mxu0 %v474
          %1364 = vmatprep.subr.bf16.mxu0 %v479
          %1365 = vmatpush1.bf16.msra.mxu0 %v478
          %1366 = vmatprep.subr.bf16.mxu0 %v483
          %1367 = vmatpush1.bf16.msra.mxu0 %v482
          %1368 = vmatprep.subr.bf16.mxu0 %v487
          %1369 = vmatpush1.bf16.msra.mxu0 %v486
          %1370 = vmatprep.subr.bf16.mxu0 0
          %1371 = vmatpush1.bf16.msra.mxu0 0
          %1372 = vmatprep.subr.bf16.mxu0 0
          %1373 = vmatpush1.bf16.msra.mxu0 0
          %1374 = vmatprep.subr.bf16.mxu0 0
          %1375 = vmatpush1.bf16.msra.mxu0 0
          %1376 = vmatprep.subr.bf16.mxu0 0
          %1377 = vmatpush1.bf16.msra.mxu0 0
          %1378 = vmatprep.subr.bf16.mxu0 0
          %1379 = vmatpush1.bf16.msra.mxu0 0
          %1380 = vmatprep.subr.bf16.mxu0 0
          %1381 = vmatpush1.bf16.msra.mxu0 0
          %1382 = vmatprep.subr.bf16.mxu0 0
          %1383 = vmatpush1.bf16.msra.mxu0 0
          %1384 = vmatprep.subr.bf16.mxu0 0
          %1385 = vmatpush1.bf16.msra.mxu0 0
          %1386 = vmatprep.mubr.bf16.mxu0 0
          %1387 = vmatmul.mubr.bf16.gmra.mrb[0].mxu0 %v1353
          %v1388 = vpop.f32.mrb[0].mxu0
          %v1389 = vadd.f32 0.0, %v1388
          %v1390 = vpop.f32.mrb[0].mxu0
          %v1391 = vadd.f32 0.0, %v1390
          %v1392 = vpop.f32.mrb[0].mxu0
          %v1393 = vpop.f32.mrb[0].mxu0
          %1394 = vdwg.mxu0
          %1395 = vmatprep.subr.bf16.mxu0 %v461
          %1396 = vmatpush1.bf16.msra.mxu0 %v460
          %1397 = vmatprep.subr.bf16.mxu0 %v465
          %1398 = vmatpush1.bf16.msra.mxu0 %v464
          %1399 = vmatprep.subr.bf16.mxu0 %v469
          %1400 = vmatpush1.bf16.msra.mxu0 %v468
          %1401 = vmatprep.subr.bf16.mxu0 %v473
          %1402 = vmatpush1.bf16.msra.mxu0 %v472
          %1403 = vmatprep.subr.bf16.mxu0 %v477
          %1404 = vmatpush1.bf16.msra.mxu0 %v476
          %1405 = vmatprep.subr.bf16.mxu0 %v481
          %1406 = vmatpush1.bf16.msra.mxu0 %v480
          %1407 = vmatprep.subr.bf16.mxu0 %v485
          %1408 = vmatpush1.bf16.msra.mxu0 %v484
          %1409 = vmatprep.subr.bf16.mxu0 %v489
          %1410 = vmatpush1.bf16.msra.mxu0 %v488
          %1411 = vmatprep.subr.bf16.mxu0 0
          %1412 = vmatpush1.bf16.msra.mxu0 0
          %1413 = vmatprep.subr.bf16.mxu0 0
          %1414 = vmatpush1.bf16.msra.mxu0 0
          %1415 = vmatprep.subr.bf16.mxu0 0
          %1416 = vmatpush1.bf16.msra.mxu0 0
          %1417 = vmatprep.subr.bf16.mxu0 0
          %1418 = vmatpush1.bf16.msra.mxu0 0
          %1419 = vmatprep.subr.bf16.mxu0 0
          %1420 = vmatpush1.bf16.msra.mxu0 0
          %1421 = vmatprep.subr.bf16.mxu0 0
          %1422 = vmatpush1.bf16.msra.mxu0 0
          %1423 = vmatprep.subr.bf16.mxu0 0
          %1424 = vmatpush1.bf16.msra.mxu0 0
          %1425 = vmatprep.subr.bf16.mxu0 0
          %1426 = vmatpush1.bf16.msra.mxu0 0
          %1427 = vmatprep.mubr.bf16.mxu0 0
          %1428 = vmatmul.mubr.bf16.gmra.mrb[0].mxu0 %v1353
          %v1429 = vpop.f32.mrb[0].mxu0
          %v1430 = vadd.f32 0.0, %v1429
          %v1431 = vpop.f32.mrb[0].mxu0
          %v1432 = vadd.f32 0.0, %v1431
          %v1433 = vpop.f32.mrb[0].mxu0
          %v1434 = vpop.f32.mrb[0].mxu0
          %1435 = vdwg.mxu0
          %v1436 = vadd.f32 %v1349, %v1389
          %v1437 = vadd.f32 %v1350, %v1391
          %v1438 = vadd.f32 %v1351, %v1430
          %v1439 = vadd.f32 %v1352, %v1432
          %v1440 = vxor.u32 %v1436, 2147483648
          %v1441 = vmul.f32 %v1440, 1.442695
          %v1442 = vpow.pop %v1441
          %v1443 = vadd.f32 %v1442, 1.0
          %v1444 = vrcp.pop %v1443
          %v1445 = vmul.f32 1.0, %v1444
          %v1446 = vxor.u32 %v1437, 2147483648
          %v1447 = vmul.f32 %v1446, 1.442695
          %v1448 = vpow.pop %v1447
          %v1449 = vadd.f32 %v1448, 1.0
          %v1450 = vrcp.pop %v1449
          %v1451 = vmul.f32 1.0, %v1450
          %v1452 = vtanh.pop %v1438
          %v1453 = vxor.u32 %v1439, 2147483648
          %v1454 = vmul.f32 %v1453, 1.442695
          %v1455 = vpow.pop %v1454
          %v1456 = vadd.f32 %v1455, 1.0
          %v1457 = vrcp.pop %v1456
          %v1458 = vmul.f32 1.0, %v1457
          %v1459 = vmul.f32 %v1451, %v1345
          %v1460 = vmul.f32 %v1445, %v1452
          %v1461 = vadd.f32 %v1459, %v1460
          %v1462 = vtanh.pop %v1461
          %v1463 = vmul.f32 %v1458, %v1462
          %v1464 = vstv %s1343
          %vm1465 = vcmp.lt.s32.totalorder %v1464, %v317
          %v1466 = vsel %vm1465, 1, 0
          %1467 = vset.pattern.permute.xlu0 0
          %1468 = vperm.xlu0 %1467, %v1466
          %v1469 = vpop.permute.xlu0 %1468
          %vm1470 = vcmp.eq.s32.totalorder %v1469, 1
          %v1471 = vsel %vm1470, %v1463, %v1344
          %1472 = vst [vmem:[#allocation2] sm:$0xff] %v1471
          %v1473 = vsel %vm1470, %v1461, %v1345
          %1474 = vst [vmem:[#allocation3] sm:$0xff] %v1473
          %v1475 = vsel %vm1470, %v1463, 0.0
          %s1476 = smul.u32 %s1342, 8
          %s1477 = scalar_lea.vmem %s274, %s1476 [#allocation11]
          %1478 = vst [vmem:[%s1477] sm:$0xff] %v1475
          %s1479 = smul.u32 %s294, 7
          %s1480 = sadd.s32 %s299, %s1479
          %v1481 = vld [vmem:[#allocation2] sm:$0xff]
          %v1482 = vld [vmem:[#allocation3] sm:$0xff]
          %s1483 = smul.u32 %s1479, 4
          %s1484 = smul.addr %s1483, 8
          %s1485 = scalar_lea.vmem %s238, %s1484 [#allocation6]
          %v1486 = vld [vmem:[%s1485] sm:$0xff]
          %v1487 = vld [vmem:[%s1485 + $0x8] sm:$0xff]
          %v1488 = vld [vmem:[%s1485 + $0x10] sm:$0xff]
          %v1489 = vld [vmem:[%s1485 + $0x18] sm:$0xff]
          %v1490 = vpack.c.bf16 %v1481, %v1481
          %1491 = vmatprep.subr.bf16.mxu0 %v459
          %1492 = vmatpush1.bf16.msra.mxu0 %v458
          %1493 = vmatprep.subr.bf16.mxu0 %v463
          %1494 = vmatpush1.bf16.msra.mxu0 %v462
          %1495 = vmatprep.subr.bf16.mxu0 %v467
          %1496 = vmatpush1.bf16.msra.mxu0 %v466
          %1497 = vmatprep.subr.bf16.mxu0 %v471
          %1498 = vmatpush1.bf16.msra.mxu0 %v470
          %1499 = vmatprep.subr.bf16.mxu0 %v475
          %1500 = vmatpush1.bf16.msra.mxu0 %v474
          %1501 = vmatprep.subr.bf16.mxu0 %v479
          %1502 = vmatpush1.bf16.msra.mxu0 %v478
          %1503 = vmatprep.subr.bf16.mxu0 %v483
          %1504 = vmatpush1.bf16.msra.mxu0 %v482
          %1505 = vmatprep.subr.bf16.mxu0 %v487
          %1506 = vmatpush1.bf16.msra.mxu0 %v486
          %1507 = vmatprep.subr.bf16.mxu0 0
          %1508 = vmatpush1.bf16.msra.mxu0 0
          %1509 = vmatprep.subr.bf16.mxu0 0
          %1510 = vmatpush1.bf16.msra.mxu0 0
          %1511 = vmatprep.subr.bf16.mxu0 0
          %1512 = vmatpush1.bf16.msra.mxu0 0
          %1513 = vmatprep.subr.bf16.mxu0 0
          %1514 = vmatpush1.bf16.msra.mxu0 0
          %1515 = vmatprep.subr.bf16.mxu0 0
          %1516 = vmatpush1.bf16.msra.mxu0 0
          %1517 = vmatprep.subr.bf16.mxu0 0
          %1518 = vmatpush1.bf16.msra.mxu0 0
          %1519 = vmatprep.subr.bf16.mxu0 0
          %1520 = vmatpush1.bf16.msra.mxu0 0
          %1521 = vmatprep.subr.bf16.mxu0 0
          %1522 = vmatpush1.bf16.msra.mxu0 0
          %1523 = vmatprep.mubr.bf16.mxu0 0
          %1524 = vmatmul.mubr.bf16.gmra.mrb[0].mxu0 %v1490
          %v1525 = vpop.f32.mrb[0].mxu0
          %v1526 = vadd.f32 0.0, %v1525
          %v1527 = vpop.f32.mrb[0].mxu0
          %v1528 = vadd.f32 0.0, %v1527
          %v1529 = vpop.f32.mrb[0].mxu0
          %v1530 = vpop.f32.mrb[0].mxu0
          %1531 = vdwg.mxu0
          %1532 = vmatprep.subr.bf16.mxu0 %v461
          %1533 = vmatpush1.bf16.msra.mxu0 %v460
          %1534 = vmatprep.subr.bf16.mxu0 %v465
          %1535 = vmatpush1.bf16.msra.mxu0 %v464
          %1536 = vmatprep.subr.bf16.mxu0 %v469
          %1537 = vmatpush1.bf16.msra.mxu0 %v468
          %1538 = vmatprep.subr.bf16.mxu0 %v473
          %1539 = vmatpush1.bf16.msra.mxu0 %v472
          %1540 = vmatprep.subr.bf16.mxu0 %v477
          %1541 = vmatpush1.bf16.msra.mxu0 %v476
          %1542 = vmatprep.subr.bf16.mxu0 %v481
          %1543 = vmatpush1.bf16.msra.mxu0 %v480
          %1544 = vmatprep.subr.bf16.mxu0 %v485
          %1545 = vmatpush1.bf16.msra.mxu0 %v484
          %1546 = vmatprep.subr.bf16.mxu0 %v489
          %1547 = vmatpush1.bf16.msra.mxu0 %v488
          %1548 = vmatprep.subr.bf16.mxu0 0
          %1549 = vmatpush1.bf16.msra.mxu0 0
          %1550 = vmatprep.subr.bf16.mxu0 0
          %1551 = vmatpush1.bf16.msra.mxu0 0
          %1552 = vmatprep.subr.bf16.mxu0 0
          %1553 = vmatpush1.bf16.msra.mxu0 0
          %1554 = vmatprep.subr.bf16.mxu0 0
          %1555 = vmatpush1.bf16.msra.mxu0 0
          %1556 = vmatprep.subr.bf16.mxu0 0
          %1557 = vmatpush1.bf16.msra.mxu0 0
          %1558 = vmatprep.subr.bf16.mxu0 0
          %1559 = vmatpush1.bf16.msra.mxu0 0
          %1560 = vmatprep.subr.bf16.mxu0 0
          %1561 = vmatpush1.bf16.msra.mxu0 0
          %1562 = vmatprep.subr.bf16.mxu0 0
          %1563 = vmatpush1.bf16.msra.mxu0 0
          %1564 = vmatprep.mubr.bf16.mxu0 0
          %1565 = vmatmul.mubr.bf16.gmra.mrb[0].mxu0 %v1490
          %v1566 = vpop.f32.mrb[0].mxu0
          %v1567 = vadd.f32 0.0, %v1566
          %v1568 = vpop.f32.mrb[0].mxu0
          %v1569 = vadd.f32 0.0, %v1568
          %v1570 = vpop.f32.mrb[0].mxu0
          %v1571 = vpop.f32.mrb[0].mxu0
          %1572 = vdwg.mxu0
          %v1573 = vadd.f32 %v1486, %v1526
          %v1574 = vadd.f32 %v1487, %v1528
          %v1575 = vadd.f32 %v1488, %v1567
          %v1576 = vadd.f32 %v1489, %v1569
          %v1577 = vxor.u32 %v1573, 2147483648
          %v1578 = vmul.f32 %v1577, 1.442695
          %v1579 = vpow.pop %v1578
          %v1580 = vadd.f32 %v1579, 1.0
          %v1581 = vrcp.pop %v1580
          %v1582 = vmul.f32 1.0, %v1581
          %v1583 = vxor.u32 %v1574, 2147483648
          %v1584 = vmul.f32 %v1583, 1.442695
          %v1585 = vpow.pop %v1584
          %v1586 = vadd.f32 %v1585, 1.0
          %v1587 = vrcp.pop %v1586
          %v1588 = vmul.f32 1.0, %v1587
          %v1589 = vtanh.pop %v1575
          %v1590 = vxor.u32 %v1576, 2147483648
          %v1591 = vmul.f32 %v1590, 1.442695
          %v1592 = vpow.pop %v1591
          %v1593 = vadd.f32 %v1592, 1.0
          %v1594 = vrcp.pop %v1593
          %v1595 = vmul.f32 1.0, %v1594
          %v1596 = vmul.f32 %v1588, %v1482
          %v1597 = vmul.f32 %v1582, %v1589
          %v1598 = vadd.f32 %v1596, %v1597
          %v1599 = vtanh.pop %v1598
          %v1600 = vmul.f32 %v1595, %v1599
          %v1601 = vstv %s1480
          %vm1602 = vcmp.lt.s32.totalorder %v1601, %v317
          %v1603 = vsel %vm1602, 1, 0
          %1604 = vset.pattern.permute.xlu0 0
          %1605 = vperm.xlu0 %1604, %v1603
          %v1606 = vpop.permute.xlu0 %1605
          %vm1607 = vcmp.eq.s32.totalorder %v1606, 1
          %v1608 = vsel %vm1607, %v1600, %v1481
          %1609 = vst [vmem:[#allocation2] sm:$0xff] %v1608
          %v1610 = vsel %vm1607, %v1598, %v1482
          %1611 = vst [vmem:[#allocation3] sm:$0xff] %v1610
          %v1612 = vsel %vm1607, %v1600, 0.0
          %s1613 = smul.u32 %s1479, 8
          %s1614 = scalar_lea.vmem %s274, %s1613 [#allocation11]
          %1615 = vst [vmem:[%s1614] sm:$0xff] %v1612
        $region52: #{tpu_custom_call.1} parent=31 // pred_fallthru
          _
        %s1616 = sand.u32 %s142, 1
        %s1617 = scalar_lea.sflag [#allocation8], %s1616
        %s1618 = sand.u32 %s142, 1
        %s1619 = smul.addr %s1618, 64
        %s1620 = scalar_lea.vmem [#allocation11], %s1619
        // Predicated region
        $region53: #{tpu_custom_call.1} parent=31 // pred_check
          %p1621 = pneg %p152
        $region54: #{tpu_custom_call.1} parent=31 // pred_check_branch
          %1623 = sbr.rel (%p1621) target = $region56
        $region55: #{tpu_custom_call.1} parent=31 // pred_region
          %s1624 = ssub.s32 1, %s29
          %s1625 = smul.u32 %s30, %s1624
          %s1626 = ssub.s32 0, %s30
          %s1627 = smul.u32 %s1626, %s29
          %s1628 = sadd.s32 %s1625, %s1627
          %s1629 = smul.u32 8, %s1628
          %s1631 = ssub.s32 1024, 1024
          %1632 = vsyncadd %s1617, %s1631
          %s1633 = smul.addr %s1629, 2
          %s1634 = sadd.s32 %s29, %s1633
          %s1635 = smul.addr %s1634, 128
          %s1636 = scalar_lea.hbm %s4, %s1635
          %s1637 = sshll.u32 %s1620, 4
          %s1638 = int_to_ptr.vmem [resolvable:$true] %s1637
          %1643 = dma.vmem_to_hbm [thread:$0]  %s1638, 1024, %s1636, %s1617, 128, 256, 8
        $region56: #{tpu_custom_call.1} parent=31 // pred_fallthru
          _
      $region32: #{tpu_custom_call.1} parent=5 // pred_fallthru
        _
      %p1644 = scmp.le.s32.totalorder 2, %s20
      // Predicated region
      $region57: #{tpu_custom_call.1} parent=5 // pred_check
        %p1645 = pneg %p1644
      $region58: #{tpu_custom_call.1} parent=5 // pred_check_branch
        %1647 = sbr.rel (%p1645) target = $region60
      $region59: #{tpu_custom_call.1} parent=5 // pred_region
        %s1648 = ssub.s32 %s20, 2
        // Predicated region
        $region61: #{tpu_custom_call.1} parent=59 // pred_check
          %p1649 = pneg %p158
        $region62: #{tpu_custom_call.1} parent=59 // pred_check_branch
          %1651 = sbr.rel (%p1649) target = $region64
        $region63: #{tpu_custom_call.1} parent=59 // pred_region
          %s1652 = sand.u32 %s143, 1
          %s1653 = scalar_lea.sflag [#allocation8], %s1652
          %s1654 = sand.u32 %s143, 1
          %s1655 = smul.addr %s1654, 64
          %s1656 = scalar_lea.vmem [#allocation11], %s1655
          %1657 = dma.done %s1653, 1024
        $region64: #{tpu_custom_call.1} parent=59 // pred_fallthru
          _
      $region60: #{tpu_custom_call.1} parent=5 // pred_fallthru
        _
    $region6: #{tpu_custom_call.1} parent=1 // loop_footer
      %s24 = sadd.s32 1, %s20
    $region7: #{tpu_custom_call.1} parent=1 // loop_footer_branch
      %19 = sbr.rel target = $region3
    $region8: #{tpu_custom_call.1} parent=1 // loop_exit
      _
    %1658 = vsyncpa [#allocation7], 1
    %s1659 = scalar_lea.sflag [#allocation7], 1
    %1660 = vsyncpa %s1659, 1
    %1661 = vsyncpa [#allocation10], 1
    %s1662 = scalar_lea.sflag [#allocation10], 1
    %1663 = vsyncpa %s1662, 1
    %1664 = vsyncpa [#allocation8], 1
    %s1665 = scalar_lea.sflag [#allocation8], 1
    %1666 = vsyncpa %s1665, 1

</llo_original>
